<compile_context>
chip_gen: v5e
topology: v5e:2x2
jax: 0.10.0
libtpu: 0.0.40
codegen_flags: <defaults>
</compile_context>

<pallas_src>
import functools
import math

import jax
import jax.numpy as jnp
from jax.experimental import pallas as pl
from jax.experimental.pallas import tpu as pltpu


def _mha_kernel(q_ref, kv_ref,
                wq_ref, bq_ref, wkv_ref, bkv_ref, wo_ref, bo_ref,
                o_ref, *, num_heads, d_k, mxu_dtype):
    G, Lq, q_dim = q_ref.shape
    _, Lk, kv_dim = kv_ref.shape
    H = num_heads
    d_model = H * d_k
    f32 = jnp.float32

    # ---- fused input projections: one matmul for Q, one for K&V -------------
    # 1/sqrt(d_k) is already folded into wq/bq by the wrapper.
    q_in = q_ref[...].reshape(G * Lq, q_dim)
    kv_in = kv_ref[...].reshape(G * Lk, kv_dim)
    q = jnp.dot(q_in, wq_ref[...], preferred_element_type=f32) + bq_ref[...]
    kv = jnp.dot(kv_in, wkv_ref[...], preferred_element_type=f32) + bkv_ref[...]
    q = q.reshape(G, Lq, d_model)
    k = kv[:, :d_model].reshape(G, Lk, d_model)      # aligned 128-lane slices
    v = kv[:, d_model:].reshape(G, Lk, d_model)

    # ---- attention: heads merged into one (H*G)-batched pair of einsums -----
    # Heads live on contiguous d_k lane slices of d_model; stack them on the
    # leading (major) axis so both dots are rank-3 batched matmuls (the form
    # Mosaic lowers directly) with a single fused softmax over all heads.
    def split_heads(x):
        return jnp.concatenate(
            [x[:, :, h * d_k:(h + 1) * d_k] for h in range(H)], axis=0)

    qh = split_heads(q).astype(mxu_dtype)            # (H*G, Lq, d_k)
    kh = split_heads(k).astype(mxu_dtype)            # (H*G, Lk, d_k)
    vh = split_heads(v).astype(mxu_dtype)            # (H*G, Lk, d_k)

    s = jnp.einsum("bqd,bkd->bqk", qh, kh, preferred_element_type=f32)
    # TODO(synk): mask (scores.masked_fill) / dropout(p_attn) not implemented.
    s = s - jnp.max(s, axis=-1, keepdims=True)       # stable softmax (f32)
    p = jnp.exp(s)
    p = p * pl.reciprocal(jnp.sum(p, axis=-1, keepdims=True), approx=True)
    ctx = jnp.einsum("bqk,bkd->bqd", p.astype(mxu_dtype), vh,
                     preferred_element_type=f32)     # (H*G, Lq, d_k)

    # ---- output projection: accumulate per-head K=d_k slabs -----------------
    # ctx is head-major on the leading axis, so instead of a lane-axis concat
    # + one K=d_model matmul we sum H matmuls with full M=G*Lq rows and
    # 128-lane-wide N.  Same MXU work, zero lane-shuffle work.
    out = None
    for h in range(H):
        ctx_h = ctx[h * G:(h + 1) * G].reshape(G * Lq, d_k).astype(mxu_dtype)
        part = jnp.dot(ctx_h, wo_ref[h * d_k:(h + 1) * d_k, :],
                       preferred_element_type=f32)
        out = part if out is None else out + part
    out = out + bo_ref[...]
    o_ref[...] = out.reshape(G, Lq, -1).astype(o_ref.dtype)


def multi_headed_attention(query, key, value, params, *, num_heads,
                           block_groups=None, mask=None, mxu_dtype=None):
    """Forward pass of MultiHeadedAttention (eval: dropout = identity, mask=None).

    query: (nb, dim_to_keep, Lq, q_dim)
    key:   (nb, dim_to_keep, Lk, k_dim)
    value: (nb, dim_to_keep, Lk, v_dim)
    params: PyTorch-layout (out, in) weights/biases of linear_q/k/v/out.
    mxu_dtype: set to jnp.bfloat16 on v6e/v7x for native-MXU operands and half
      the activation/weight DMA bytes (matmuls still accumulate in f32).
    """
    if mask is not None:
        # TODO(synk): masked attention (mask.transpose + masked_fill) not implemented.
        raise NotImplementedError("mask path not implemented")

    nb, dim_keep, Lq, q_dim = query.shape
    Lk, k_dim = key.shape[2], key.shape[3]
    v_dim = value.shape[3]
    assert value.shape[2] == Lk
    wq, bq = params["wq"], params["bq"]
    wk, bk = params["wk"], params["bk"]
    wv, bv = params["wv"], params["bv"]
    wo, bo = params["wo"], params["bo"]
    d_model = wq.shape[0]
    assert d_model % num_heads == 0
    d_k = d_model // num_heads
    q_out = wo.shape[0]                              # == q_dim
    kv_dim = k_dim + v_dim
    out_dtype = query.dtype
    if mxu_dtype is None:
        mxu_dtype = query.dtype
    scale = 1.0 / math.sqrt(d_k)

    # ---- tile sizing ---------------------------------------------------------
    B = nb * dim_keep
    if block_groups is None:
        # Big tiles amortize the ~0.35us/step pipeline overhead and give the
        # projection matmuls MXU-sized row counts (G*Lq >= 256 needs G >= 32 at
        # Lq=8).  Cap at 128 groups (a few MiB/step -> safe for v7x's 64 MiB
        # VMEM) and keep >= 2 grid steps when B >= 2 so both v7x TensorCores
        # get work.  On single-TC v5e/v6e, pass block_groups=B for one maximal
        # step instead.
        block_groups = max(1, min(128, pl.cdiv(B, 2)))
    G = min(block_groups, B)
    n_blocks = pl.cdiv(B, G)
    Bp = n_blocks * G

    # ---- operand prep (wrapper-side, one-time) -------------------------------
    q2 = query.reshape(B, Lq, q_dim).astype(mxu_dtype)
    # Fuse K and V inputs into one lane-dense (Lk, k_dim+v_dim) tensor.
    kv2 = jnp.concatenate([key.reshape(B, Lk, k_dim),
                           value.reshape(B, Lk, v_dim)], axis=-1).astype(mxu_dtype)
    if Bp != B:
        pad = ((0, Bp - B), (0, 0), (0, 0))
        q2 = jnp.pad(q2, pad)
        kv2 = jnp.pad(kv2, pad)

    # Matmul-ready weights.  1/sqrt(d_k) folded into the Q projection; K and V
    # projections fused into one block-diagonal (kv_dim, 2*d_model) weight.
    wq_t = (wq.T * scale).astype(mxu_dtype)
    bq2 = (bq * scale).reshape(1, d_model).astype(jnp.float32)
    wkv_t = jnp.zeros((kv_dim, 2 * d_model), mxu_dtype)
    wkv_t = wkv_t.at[:k_dim, :d_model].set(wk.T.astype(mxu_dtype))
    wkv_t = wkv_t.at[k_dim:, d_model:].set(wv.T.astype(mxu_dtype))
    bkv2 = jnp.concatenate([bk, bv]).reshape(1, 2 * d_model).astype(jnp.float32)
    wo_t = wo.T.astype(mxu_dtype)
    bo2 = bo.reshape(1, q_out).astype(jnp.float32)

    # Advisory cost estimate so XLA schedules surrounding HLO around this call.
    flops = 2 * Bp * (Lq * q_dim * d_model
                      + Lk * kv_dim * (2 * d_model)
                      + 2 * num_heads * Lq * Lk * d_k
                      + Lq * d_model * q_out)
    transcendentals = Bp * num_heads * Lq * (Lk + 1)
    bytes_accessed = (
        q2.size * q2.dtype.itemsize + kv2.size * kv2.dtype.itemsize
        + (wq_t.size + wkv_t.size + wo_t.size) * jnp.dtype(mxu_dtype).itemsize
        + (bq2.size + bkv2.size + bo2.size) * 4
        + Bp * Lq * q_out * jnp.dtype(out_dtype).itemsize)
    cost = pl.CostEstimate(flops=int(flops),
                           transcendentals=int(transcendentals),
                           bytes_accessed=int(bytes_accessed))

    kernel = functools.partial(_mha_kernel, num_heads=num_heads, d_k=d_k,
                               mxu_dtype=mxu_dtype)
    const2 = lambda i: (0, 0)

    out = pl.pallas_call(
        kernel,
        out_shape=jax.ShapeDtypeStruct((Bp, Lq, q_out), out_dtype),
        grid=(n_blocks,),
        in_specs=[
            pl.BlockSpec((G, Lq, q_dim), lambda i: (i, 0, 0)),
            pl.BlockSpec((G, Lk, kv_dim), lambda i: (i, 0, 0)),
            pl.BlockSpec((q_dim, d_model), const2),
            pl.BlockSpec((1, d_model), const2),
            pl.BlockSpec((kv_dim, 2 * d_model), const2),
            pl.BlockSpec((1, 2 * d_model), const2),
            pl.BlockSpec((d_model, q_out), const2),
            pl.BlockSpec((1, q_out), const2),
        ],
        out_specs=pl.BlockSpec((G, Lq, q_out), lambda i: (i, 0, 0)),
        compiler_params=pltpu.CompilerParams(
            dimension_semantics=("parallel",),
            # Raise the scoped VMEM limit so the limit (16/32 MiB defaults),
            # not the hardware, never forces smaller tiles; 48 MiB stays under
            # v7x's 64 MiB physical VMEM.
            vmem_limit_bytes=48 * 1024 * 1024),
        cost_estimate=cost,
    )(q2, kv2, wq_t, bq2, wkv_t, bkv2, wo_t, bo2)

    return out[:B].reshape(nb, dim_keep, Lq, q_out)


def reference_forward(query, key, value, params, num_heads):
    """Pure-JAX replica of the PyTorch forward (mask=None, eval mode)."""
    d_model = params["wq"].shape[0]
    d_k = d_model // num_heads
    nb, dtk = query.shape[0], query.shape[1]

    def lin(x, w, b):
        return x @ w.T + b

    def split_heads(x):
        return jnp.swapaxes(x.reshape(nb, dtk, -1, num_heads, d_k), 2, 3)

    q = split_heads(lin(query, params["wq"], params["bq"]))
    k = split_heads(lin(key, params["wk"], params["bk"]))
    v = split_heads(lin(value, params["wv"], params["bv"]))
    scores = jnp.einsum("...qd,...kd->...qk", q, k) / math.sqrt(d_k)
    p = jax.nn.softmax(scores, axis=-1)
    x = jnp.einsum("...qk,...kd->...qd", p, v)
    x = jnp.swapaxes(x, 2, 3).reshape(nb, dtk, -1, num_heads * d_k)
    return lin(x, params["wo"], params["bo"])


if __name__ == "__main__":
    # Small shapes consistent with the module's forward:
    # query (nb, dim_to_keep, Lq, q_dim), key/value (nb, dim_to_keep, Lk, *_dim).
    nb, dim_keep, Lq, Lk = 2, 3, 8, 16
    q_dim, k_dim, v_dim, d_model, num_heads = 128, 64, 64, 128, 4

    rng = jax.random.PRNGKey(0)
    keys = jax.random.split(rng, 11)
    query = jax.random.normal(keys[0], (nb, dim_keep, Lq, q_dim), jnp.float32)
    key_in = jax.random.normal(keys[1], (nb, dim_keep, Lk, k_dim), jnp.float32)
    value_in = jax.random.normal(keys[2], (nb, dim_keep, Lk, v_dim), jnp.float32)

    def linear_params(kw, kb, out_f, in_f):
        bound = 1.0 / math.sqrt(in_f)
        w = jax.random.uniform(kw, (out_f, in_f), jnp.float32, -bound, bound)
        b = jax.random.uniform(kb, (out_f,), jnp.float32, -bound, bound)
        return w, b

    wq, bq = linear_params(keys[3], keys[4], d_model, q_dim)
    wk, bk = linear_params(keys[5], keys[6], d_model, k_dim)
    wv, bv = linear_params(keys[7], keys[8], d_model, v_dim)
    wo, bo = linear_params(keys[9], keys[10], q_dim, d_model)
    params = dict(wq=wq, bq=bq, wk=wk, bk=bk, wv=wv, bv=bv, wo=wo, bo=bo)

    with jax.default_matmul_precision("highest"):
        ref = reference_forward(query, key_in, value_in, params, num_heads)

    # f32 run, auto tile sizing: B=6 groups -> G=3, two parallel grid steps.
    out = multi_headed_attention(query, key_in, value_in, params,
                                 num_heads=num_heads)
    out = jax.block_until_ready(out)
    assert out.shape == (nb, dim_keep, Lq, q_dim)
    err = float(jnp.max(jnp.abs(out - ref)))
    # Tolerance policy: f32 MXU matmuls + EUP approx-reciprocal softmax divide.
    assert jnp.allclose(out, ref, atol=5e-3, rtol=5e-3), f"f32 mismatch, max err {err}"

    # bf16 MXU-operand run (v6e/v7x recommendation); block_groups=4 exercises
    # the group-padding path (B=6 -> padded to 8, two grid steps).
    out_bf16 = multi_headed_attention(query, key_in, value_in, params,
                                      num_heads=num_heads, block_groups=4,
                                      mxu_dtype=jnp.bfloat16)
    out_bf16 = jax.block_until_ready(out_bf16)
    err_bf = float(jnp.max(jnp.abs(out_bf16 - ref)))
    assert jnp.allclose(out_bf16, ref, atol=1e-1, rtol=1e-1), \
        f"bf16 mismatch, max err {err_bf}"

    print("KERNEL_OK")
</pallas_src>

<mosaic_0001>
module attributes {stable_mosaic.version = 11 : i64} {
  func.func @_mha_kernel(%arg0: i32, %arg1: memref<3x8x128xf32, #tpu.memory_space<vmem>>, %arg2: memref<3x16x128xf32, #tpu.memory_space<vmem>>, %arg3: memref<128x128xf32, #tpu.memory_space<vmem>>, %arg4: memref<1x128xf32, #tpu.memory_space<vmem>>, %arg5: memref<128x256xf32, #tpu.memory_space<vmem>>, %arg6: memref<1x256xf32, #tpu.memory_space<vmem>>, %arg7: memref<128x128xf32, #tpu.memory_space<vmem>>, %arg8: memref<1x128xf32, #tpu.memory_space<vmem>>, %arg9: memref<3x8x128xf32, #tpu.memory_space<vmem>>) attributes {dimension_semantics = [#tpu.dimension_semantics<parallel>], iteration_bounds = array<i64: 2>, scalar_prefetch = 0 : i64, scratch_operands = 0 : i64, tpu.core_type = #tpu.core_type<tc>, window_params = [{transform_indices = @transform_0, window_bounds = array<i64: 3, 8, 128>}, {transform_indices = @transform_1, window_bounds = array<i64: 3, 16, 128>}, {pipeline_mode = #tpu.pipeline_mode<synchronous>, transform_indices = @transform_2, window_bounds = array<i64: 128, 128>}, {pipeline_mode = #tpu.pipeline_mode<synchronous>, transform_indices = @transform_3, window_bounds = array<i64: 1, 128>}, {pipeline_mode = #tpu.pipeline_mode<synchronous>, transform_indices = @transform_4, window_bounds = array<i64: 128, 256>}, {pipeline_mode = #tpu.pipeline_mode<synchronous>, transform_indices = @transform_5, window_bounds = array<i64: 1, 256>}, {pipeline_mode = #tpu.pipeline_mode<synchronous>, transform_indices = @transform_6, window_bounds = array<i64: 128, 128>}, {pipeline_mode = #tpu.pipeline_mode<synchronous>, transform_indices = @transform_7, window_bounds = array<i64: 1, 128>}, {transform_indices = @transform_8, window_bounds = array<i64: 3, 8, 128>}]} {
    %c0 = arith.constant 0 : index
    %c0_0 = arith.constant 0 : index
    %c0_1 = arith.constant 0 : index
    %0 = vector.load %arg1[%c0, %c0_0, %c0_1] : memref<3x8x128xf32, #tpu.memory_space<vmem>>, vector<3x8x128xf32>
    %1 = vector.shape_cast %0 : vector<3x8x128xf32> to vector<24x128xf32>
    %c0_2 = arith.constant 0 : index
    %c0_3 = arith.constant 0 : index
    %c0_4 = arith.constant 0 : index
    %2 = vector.load %arg2[%c0_2, %c0_3, %c0_4] : memref<3x16x128xf32, #tpu.memory_space<vmem>>, vector<3x16x128xf32>
    %3 = vector.shape_cast %2 : vector<3x16x128xf32> to vector<48x128xf32>
    %c0_5 = arith.constant 0 : index
    %c0_6 = arith.constant 0 : index
    %4 = vector.load %arg3[%c0_5, %c0_6] : memref<128x128xf32, #tpu.memory_space<vmem>>, vector<128x128xf32>
    %cst = arith.constant dense<0.000000e+00> : vector<24x128xf32>
    %5 = tpu.matmul %1, %4, %cst {dimension_numbers = #tpu.dot_dimension_numbers<[1], [0], [0], [1], [0, 0, 1, 1], [], []>} : vector<24x128xf32>, vector<128x128xf32>, vector<24x128xf32> -> vector<24x128xf32>
    %c0_7 = arith.constant 0 : index
    %c0_8 = arith.constant 0 : index
    %6 = vector.load %arg4[%c0_7, %c0_8] : memref<1x128xf32, #tpu.memory_space<vmem>>, vector<1x128xf32>
    %7 = vector.broadcast %6 : vector<1x128xf32> to vector<24x128xf32>
    %8 = arith.addf %5, %7 : vector<24x128xf32>
    %c0_9 = arith.constant 0 : index
    %c0_10 = arith.constant 0 : index
    %9 = vector.load %arg5[%c0_9, %c0_10] : memref<128x256xf32, #tpu.memory_space<vmem>>, vector<128x256xf32>
    %cst_11 = arith.constant dense<0.000000e+00> : vector<48x256xf32>
    %10 = tpu.matmul %3, %9, %cst_11 {dimension_numbers = #tpu.dot_dimension_numbers<[1], [0], [0], [1], [0, 0, 1, 1], [], []>} : vector<48x128xf32>, vector<128x256xf32>, vector<48x256xf32> -> vector<48x256xf32>
    %c0_12 = arith.constant 0 : index
    %c0_13 = arith.constant 0 : index
    %11 = vector.load %arg6[%c0_12, %c0_13] : memref<1x256xf32, #tpu.memory_space<vmem>>, vector<1x256xf32>
    %12 = vector.broadcast %11 : vector<1x256xf32> to vector<48x256xf32>
    %13 = arith.addf %10, %12 : vector<48x256xf32>
    %14 = vector.shape_cast %8 : vector<24x128xf32> to vector<3x8x128xf32>
    %15 = vector.extract_strided_slice %13 {offsets = [0, 0], sizes = [48, 128], strides = [1, 1]} : vector<48x256xf32> to vector<48x128xf32>
    %16 = vector.shape_cast %15 : vector<48x128xf32> to vector<3x16x128xf32>
    %17 = vector.extract_strided_slice %13 {offsets = [0, 128], sizes = [48, 128], strides = [1, 1]} : vector<48x256xf32> to vector<48x128xf32>
    %18 = vector.shape_cast %17 : vector<48x128xf32> to vector<3x16x128xf32>
    %19 = vector.extract_strided_slice %14 {offsets = [0, 0, 0], sizes = [3, 8, 32], strides = [1, 1, 1]} : vector<3x8x128xf32> to vector<3x8x32xf32>
    %20 = vector.extract_strided_slice %14 {offsets = [0, 0, 32], sizes = [3, 8, 32], strides = [1, 1, 1]} : vector<3x8x128xf32> to vector<3x8x32xf32>
    %21 = vector.extract_strided_slice %14 {offsets = [0, 0, 64], sizes = [3, 8, 32], strides = [1, 1, 1]} : vector<3x8x128xf32> to vector<3x8x32xf32>
    %22 = vector.extract_strided_slice %14 {offsets = [0, 0, 96], sizes = [3, 8, 32], strides = [1, 1, 1]} : vector<3x8x128xf32> to vector<3x8x32xf32>
    %23 = tpu.concatenate %19, %20, %21, %22 in 0 : vector<3x8x32xf32>, vector<3x8x32xf32>, vector<3x8x32xf32>, vector<3x8x32xf32> -> vector<12x8x32xf32>
    %24 = vector.extract_strided_slice %16 {offsets = [0, 0, 0], sizes = [3, 16, 32], strides = [1, 1, 1]} : vector<3x16x128xf32> to vector<3x16x32xf32>
    %25 = vector.extract_strided_slice %16 {offsets = [0, 0, 32], sizes = [3, 16, 32], strides = [1, 1, 1]} : vector<3x16x128xf32> to vector<3x16x32xf32>
    %26 = vector.extract_strided_slice %16 {offsets = [0, 0, 64], sizes = [3, 16, 32], strides = [1, 1, 1]} : vector<3x16x128xf32> to vector<3x16x32xf32>
    %27 = vector.extract_strided_slice %16 {offsets = [0, 0, 96], sizes = [3, 16, 32], strides = [1, 1, 1]} : vector<3x16x128xf32> to vector<3x16x32xf32>
    %28 = tpu.concatenate %24, %25, %26, %27 in 0 : vector<3x16x32xf32>, vector<3x16x32xf32>, vector<3x16x32xf32>, vector<3x16x32xf32> -> vector<12x16x32xf32>
    %29 = vector.extract_strided_slice %18 {offsets = [0, 0, 0], sizes = [3, 16, 32], strides = [1, 1, 1]} : vector<3x16x128xf32> to vector<3x16x32xf32>
    %30 = vector.extract_strided_slice %18 {offsets = [0, 0, 32], sizes = [3, 16, 32], strides = [1, 1, 1]} : vector<3x16x128xf32> to vector<3x16x32xf32>
    %31 = vector.extract_strided_slice %18 {offsets = [0, 0, 64], sizes = [3, 16, 32], strides = [1, 1, 1]} : vector<3x16x128xf32> to vector<3x16x32xf32>
    %32 = vector.extract_strided_slice %18 {offsets = [0, 0, 96], sizes = [3, 16, 32], strides = [1, 1, 1]} : vector<3x16x128xf32> to vector<3x16x32xf32>
    %33 = tpu.concatenate %29, %30, %31, %32 in 0 : vector<3x16x32xf32>, vector<3x16x32xf32>, vector<3x16x32xf32>, vector<3x16x32xf32> -> vector<12x16x32xf32>
    "tpu.trace_start"() <{level = 10 : i32, message = "bqd,bkd->bqk"}> : () -> ()
    %cst_14 = arith.constant dense<0.000000e+00> : vector<12x8x16xf32>
    %34 = tpu.matmul %23, %28, %cst_14 {dimension_numbers = #tpu.dot_dimension_numbers<[2], [2], [1], [1], [0, 0, 0, 1, 1, 1], [0], [0]>} : vector<12x8x32xf32>, vector<12x16x32xf32>, vector<12x8x16xf32> -> vector<12x8x16xf32>
    "tpu.trace_stop"() : () -> ()
    %cst_15 = arith.constant dense<0xFF800000> : vector<12x8xf32>
    %35 = vector.multi_reduction <maximumf>, %34, %cst_15 [2] : vector<12x8x16xf32> to vector<12x8xf32>
    %36 = vector.shape_cast %35 : vector<12x8xf32> to vector<12x8x1xf32>
    %37 = vector.broadcast %36 : vector<12x8x1xf32> to vector<12x8x16xf32>
    %38 = arith.subf %34, %37 : vector<12x8x16xf32>
    %39 = math.exp %38 : vector<12x8x16xf32>
    %cst_16 = arith.constant dense<0.000000e+00> : vector<12x8xf32>
    %40 = vector.multi_reduction <add>, %39, %cst_16 [2] : vector<12x8x16xf32> to vector<12x8xf32>
    %41 = vector.shape_cast %40 : vector<12x8xf32> to vector<12x8x1xf32>
    %42 = tpu.reciprocal %41 {approx = true} : vector<12x8x1xf32> -> vector<12x8x1xf32>
    %43 = vector.broadcast %42 : vector<12x8x1xf32> to vector<12x8x16xf32>
    %44 = arith.mulf %39, %43 : vector<12x8x16xf32>
    "tpu.trace_start"() <{level = 10 : i32, message = "bqk,bkd->bqd"}> : () -> ()
    %cst_17 = arith.constant dense<0.000000e+00> : vector<12x8x32xf32>
    %45 = tpu.matmul %44, %33, %cst_17 {dimension_numbers = #tpu.dot_dimension_numbers<[2], [1], [1], [2], [0, 0, 0, 1, 1, 2], [0], [0]>} : vector<12x8x16xf32>, vector<12x16x32xf32>, vector<12x8x32xf32> -> vector<12x8x32xf32>
    "tpu.trace_stop"() : () -> ()
    %46 = vector.extract_strided_slice %45 {offsets = [0, 0, 0], sizes = [3, 8, 32], strides = [1, 1, 1]} : vector<12x8x32xf32> to vector<3x8x32xf32>
    %47 = vector.shape_cast %46 : vector<3x8x32xf32> to vector<24x32xf32>
    %c0_18 = arith.constant 0 : index
    %c0_19 = arith.constant 0 : index
    %48 = vector.load %arg7[%c0_18, %c0_19] : memref<128x128xf32, #tpu.memory_space<vmem>>, vector<32x128xf32>
    %cst_20 = arith.constant dense<0.000000e+00> : vector<24x128xf32>
    %49 = tpu.matmul %47, %48, %cst_20 {dimension_numbers = #tpu.dot_dimension_numbers<[1], [0], [0], [1], [0, 0, 1, 1], [], []>} : vector<24x32xf32>, vector<32x128xf32>, vector<24x128xf32> -> vector<24x128xf32>
    %50 = vector.extract_strided_slice %45 {offsets = [3, 0, 0], sizes = [3, 8, 32], strides = [1, 1, 1]} : vector<12x8x32xf32> to vector<3x8x32xf32>
    %51 = vector.shape_cast %50 : vector<3x8x32xf32> to vector<24x32xf32>
    %c32 = arith.constant 32 : index
    %c0_21 = arith.constant 0 : index
    %52 = vector.load %arg7[%c32, %c0_21] : memref<128x128xf32, #tpu.memory_space<vmem>>, vector<32x128xf32>
    %cst_22 = arith.constant dense<0.000000e+00> : vector<24x128xf32>
    %53 = tpu.matmul %51, %52, %cst_22 {dimension_numbers = #tpu.dot_dimension_numbers<[1], [0], [0], [1], [0, 0, 1, 1], [], []>} : vector<24x32xf32>, vector<32x128xf32>, vector<24x128xf32> -> vector<24x128xf32>
    %54 = arith.addf %49, %53 : vector<24x128xf32>
    %55 = vector.extract_strided_slice %45 {offsets = [6, 0, 0], sizes = [3, 8, 32], strides = [1, 1, 1]} : vector<12x8x32xf32> to vector<3x8x32xf32>
    %56 = vector.shape_cast %55 : vector<3x8x32xf32> to vector<24x32xf32>
    %c64 = arith.constant 64 : index
    %c0_23 = arith.constant 0 : index
    %57 = vector.load %arg7[%c64, %c0_23] : memref<128x128xf32, #tpu.memory_space<vmem>>, vector<32x128xf32>
    %cst_24 = arith.constant dense<0.000000e+00> : vector<24x128xf32>
    %58 = tpu.matmul %56, %57, %cst_24 {dimension_numbers = #tpu.dot_dimension_numbers<[1], [0], [0], [1], [0, 0, 1, 1], [], []>} : vector<24x32xf32>, vector<32x128xf32>, vector<24x128xf32> -> vector<24x128xf32>
    %59 = arith.addf %54, %58 : vector<24x128xf32>
    %60 = vector.extract_strided_slice %45 {offsets = [9, 0, 0], sizes = [3, 8, 32], strides = [1, 1, 1]} : vector<12x8x32xf32> to vector<3x8x32xf32>
    %61 = vector.shape_cast %60 : vector<3x8x32xf32> to vector<24x32xf32>
    %c96 = arith.constant 96 : index
    %c0_25 = arith.constant 0 : index
    %62 = vector.load %arg7[%c96, %c0_25] : memref<128x128xf32, #tpu.memory_space<vmem>>, vector<32x128xf32>
    %cst_26 = arith.constant dense<0.000000e+00> : vector<24x128xf32>
    %63 = tpu.matmul %61, %62, %cst_26 {dimension_numbers = #tpu.dot_dimension_numbers<[1], [0], [0], [1], [0, 0, 1, 1], [], []>} : vector<24x32xf32>, vector<32x128xf32>, vector<24x128xf32> -> vector<24x128xf32>
    %64 = arith.addf %59, %63 : vector<24x128xf32>
    %c0_27 = arith.constant 0 : index
    %c0_28 = arith.constant 0 : index
    %65 = vector.load %arg8[%c0_27, %c0_28] : memref<1x128xf32, #tpu.memory_space<vmem>>, vector<1x128xf32>
    %66 = vector.broadcast %65 : vector<1x128xf32> to vector<24x128xf32>
    %67 = arith.addf %64, %66 : vector<24x128xf32>
    %68 = vector.shape_cast %67 : vector<24x128xf32> to vector<3x8x128xf32>
    %c0_29 = arith.constant 0 : index
    %c0_30 = arith.constant 0 : index
    %c0_31 = arith.constant 0 : index
    %69 = vector.load %arg9[%c0_29, %c0_30, %c0_31] : memref<3x8x128xf32, #tpu.memory_space<vmem>>, vector<3x8x128xf32>
    tpu.vector_store %arg9[%c0_29, %c0_30, %c0_31], %68 {strides = array<i32>} : memref<3x8x128xf32, #tpu.memory_space<vmem>>, vector<3x8x128xf32>,
    return
  }
  func.func @transform_0(%arg0: i32) -> (i32, i32, i32) {
    %c0_i32 = arith.constant 0 : i32
    %c0_i32_0 = arith.constant 0 : i32
    %c0_i32_1 = arith.constant 0 : i32
    return %arg0, %c0_i32, %c0_i32_0 : i32, i32, i32
  }
  func.func @transform_1(%arg0: i32) -> (i32, i32, i32) {
    %c0_i32 = arith.constant 0 : i32
    %c0_i32_0 = arith.constant 0 : i32
    %c0_i32_1 = arith.constant 0 : i32
    return %arg0, %c0_i32, %c0_i32_0 : i32, i32, i32
  }
  func.func @transform_2(%arg0: i32) -> (i32, i32) {
    %c0_i32 = arith.constant 0 : i32
    %c0_i32_0 = arith.constant 0 : i32
    %c0_i32_1 = arith.constant 0 : i32
    return %c0_i32, %c0_i32_0 : i32, i32
  }
  func.func @transform_3(%arg0: i32) -> (i32, i32) {
    %c0_i32 = arith.constant 0 : i32
    %c0_i32_0 = arith.constant 0 : i32
    %c0_i32_1 = arith.constant 0 : i32
    return %c0_i32, %c0_i32_0 : i32, i32
  }
  func.func @transform_4(%arg0: i32) -> (i32, i32) {
    %c0_i32 = arith.constant 0 : i32
    %c0_i32_0 = arith.constant 0 : i32
    %c0_i32_1 = arith.constant 0 : i32
    return %c0_i32, %c0_i32_0 : i32, i32
  }
  func.func @transform_5(%arg0: i32) -> (i32, i32) {
    %c0_i32 = arith.constant 0 : i32
    %c0_i32_0 = arith.constant 0 : i32
    %c0_i32_1 = arith.constant 0 : i32
    return %c0_i32, %c0_i32_0 : i32, i32
  }
  func.func @transform_6(%arg0: i32) -> (i32, i32) {
    %c0_i32 = arith.constant 0 : i32
    %c0_i32_0 = arith.constant 0 : i32
    %c0_i32_1 = arith.constant 0 : i32
    return %c0_i32, %c0_i32_0 : i32, i32
  }
  func.func @transform_7(%arg0: i32) -> (i32, i32) {
    %c0_i32 = arith.constant 0 : i32
    %c0_i32_0 = arith.constant 0 : i32
    %c0_i32_1 = arith.constant 0 : i32
    return %c0_i32, %c0_i32_0 : i32, i32
  }
  func.func @transform_8(%arg0: i32) -> (i32, i32, i32) {
    %c0_i32 = arith.constant 0 : i32
    %c0_i32_0 = arith.constant 0 : i32
    %c0_i32_1 = arith.constant 0 : i32
    return %arg0, %c0_i32, %c0_i32_0 : i32, i32, i32
  }
}

</mosaic_0001>

<llo_original>
// kernel: tpu_custom_call.1
$region0: #{tpu_custom_call.1}
  #allocation0 [shape = 'u32[]', space=smem, size = 0x4, offset = 0x4, fixed_abs, tag = 'smem constant byte address 0x4 - core index']
  #allocation1 [shape = 'u32[72,128]{1,0:T(1,128)}', space=vmem, size = 0x9000, scoped, tag = 'internal scratch']
  %s0 = inlined_call_operand.hbm [shape: f32[6,8,128], index: 0, kind: input, shape index: {}]
  %s1 = inlined_call_operand.hbm [shape: f32[6,16,128], index: 1, kind: input, shape index: {}]
  %s2 = inlined_call_operand.hbm [shape: f32[128,128], index: 2, kind: input, shape index: {}]
  %s3 = inlined_call_operand.vmem [shape: f32[1,128], index: 3, kind: input, shape index: {}]
  %s4 = inlined_call_operand.hbm [shape: f32[128,256], index: 4, kind: input, shape index: {}]
  %s5 = inlined_call_operand.vmem [shape: f32[1,256], index: 5, kind: input, shape index: {}]
  %s6 = inlined_call_operand.hbm [shape: f32[128,128], index: 6, kind: input, shape index: {}]
  %s7 = inlined_call_operand.vmem [shape: f32[1,128], index: 7, kind: input, shape index: {}]
  %s8 = inlined_call_operand.hbm [shape: f32[6,8,128], index: 8, kind: output, shape index: {}]
  %s9 = sld [smem:[#allocation0]]
  $region85: #{tpu_custom_call.1} parent=0
    _
  %s11 = ssub.s32 1, %s9
  %s12 = scalar_select 0, %s11, %s9
  $region1: #{tpu_custom_call.1} parent=0
    #allocation2 [shape = 'u8[24576]{0}', space=vmem, size = 0x6000, scoped, tag = 'input window, operand 0']
    #allocation3 [shape = 's32[2]{0}', space=sflag, size = 0x8, scoped, tag = 'scoped memory for tpu_custom_call.1']
    #allocation4 [shape = 's32[2]{0}', space=sflag, size = 0x8, scoped, tag = 'scoped memory for tpu_custom_call.1']
    #allocation5 [shape = 'u8[49152]{0}', space=vmem, size = 0xc000, scoped, tag = 'input window, operand 1']
    #allocation6 [shape = 's32[2]{0}', space=sflag, size = 0x8, scoped, tag = 'scoped memory for tpu_custom_call.1']
    #allocation7 [shape = 'u8[65536]{0}', space=vmem, size = 0x10000, scoped, tag = 'input window, operand 2, single buffered']
    #allocation8 [shape = 'u8[131072]{0}', space=vmem, size = 0x20000, scoped, tag = 'input window, operand 4, single buffered']
    #allocation9 [shape = 's32[1]{0}', space=sflag, size = 0x4, scoped, tag = 'scoped memory for tpu_custom_call.1']
    #allocation10 [shape = 'u8[65536]{0}', space=vmem, size = 0x10000, scoped, tag = 'input window, operand 6, single buffered']
    #allocation11 [shape = 'u8[24576]{0}', space=vmem, size = 0x6000, scoped, tag = 'output window, operand 0']
    %13 = vsyncpa [#allocation3], 0
    %s14 = scalar_lea.sflag [#allocation3], 1
    %15 = vsyncpa %s14, 0
    %16 = vsyncpa [#allocation6], 0
    %s17 = scalar_lea.sflag [#allocation6], 1
    %18 = vsyncpa %s17, 0
    %19 = vsyncpa [#allocation9], 0
    %20 = vsyncpa [#allocation4], 0
    %s21 = scalar_lea.sflag [#allocation4], 1
    %22 = vsyncpa %s21, 0
    loop: start=0, step=1, limit=4
    $region2: #{tpu_custom_call.1} parent=1 // loop_pre_header
      _
    $region3: #{tpu_custom_call.1} parent=1 // loop_header
      %s24 = sphi 0, %s28
      %p25 = scmp.ge.s32.totalorder %s24, 4
      %s34 = sphi 0, %s36
      %s37 = sphi 0, %s34
      %s38 = sphi 0, %s37
      %s54 = sphi 0, %s38
      %s60 = sphi 0, %s62
      %s63 = sphi 0, %s60
      %s64 = sphi 0, %s63
      %s80 = sphi 0, %s64
      %s84 = sphi 0, %s84
      %s86 = sphi 0, %s84
      %s87 = sphi 0, %s86
      %s101 = sphi 0, %s87
      %s105 = sphi 0, %s105
      %s107 = sphi 0, %s105
      %s108 = sphi 0, %s107
      %s122 = sphi 0, %s108
      %s126 = sphi 0, %s126
      %s128 = sphi 0, %s126
      %s129 = sphi 0, %s128
      %s143 = sphi 0, %s129
      %s147 = sphi 0, %s147
      %s149 = sphi 0, %s147
      %s150 = sphi 0, %s149
      %s164 = sphi 0, %s150
      %s168 = sphi 0, %s168
      %s170 = sphi 0, %s168
      %s171 = sphi 0, %s170
      %s185 = sphi 0, %s171
      %s189 = sphi 0, %s189
      %s191 = sphi 0, %s189
      %s192 = sphi 0, %s191
      %s206 = sphi 0, %s192
      %s212 = sphi 0, %s214
      %s215 = sphi 0, %s212
      %s216 = sphi 0, %s215
      %s232 = sphi 0, %s216
    $region4: #{tpu_custom_call.1} parent=1 // loop_header_branch
      %27 = sbr.rel (%p25) target = $region8
    $region5: #{tpu_custom_call.1} parent=1 // loop_body
      %s29 = ssub.s32 %s24, 1
      %s30 = ssub.s32 %s24, 2
      %s31 = sadd.s32 %s24, 1
      %s32 = ssub.s32 %s24, %s31
      %p33 = scmp.eq.s32.totalorder %s32, 0
      %s35 = sadd.s32 %s34, 1
      %s36 = scalar_select %p33, %s34, %s35
      %p39 = pneg %p33
      %p40 = scmp.eq.s32.totalorder %s24, 1
      %p41 = por %p39, %p40
      %p42 = scmp.ne.s32.totalorder %s34, %s37
      %p43 = scmp.eq.s32.totalorder %s24, 0
      %p44 = por %p42, %p43
      %p45 = scmp.ne.s32.totalorder %s34, %s37
      %p46 = scmp.eq.s32.totalorder %s29, 1
      %p47 = por %p45, %p46
      %p48 = scmp.ne.s32.totalorder %s37, %s38
      %p49 = scmp.eq.s32.totalorder %s29, 0
      %p50 = por %p48, %p49
      %p51 = scmp.ne.s32.totalorder %s37, %s38
      %p52 = scmp.eq.s32.totalorder %s30, 1
      %p53 = por %p51, %p52
      %p55 = scmp.ne.s32.totalorder %s38, %s54
      %p56 = scmp.eq.s32.totalorder %s30, 0
      %p57 = por %p55, %p56
      %s58 = ssub.s32 %s24, %s31
      %p59 = scmp.eq.s32.totalorder %s58, 0
      %s61 = sadd.s32 %s60, 1
      %s62 = scalar_select %p59, %s60, %s61
      %p65 = pneg %p59
      %p66 = scmp.eq.s32.totalorder %s24, 1
      %p67 = por %p65, %p66
      %p68 = scmp.ne.s32.totalorder %s60, %s63
      %p69 = scmp.eq.s32.totalorder %s24, 0
      %p70 = por %p68, %p69
      %p71 = scmp.ne.s32.totalorder %s60, %s63
      %p72 = scmp.eq.s32.totalorder %s29, 1
      %p73 = por %p71, %p72
      %p74 = scmp.ne.s32.totalorder %s63, %s64
      %p75 = scmp.eq.s32.totalorder %s29, 0
      %p76 = por %p74, %p75
      %p77 = scmp.ne.s32.totalorder %s63, %s64
      %p78 = scmp.eq.s32.totalorder %s30, 1
      %p79 = por %p77, %p78
      %p81 = scmp.ne.s32.totalorder %s64, %s80
      %p82 = scmp.eq.s32.totalorder %s30, 0
      %p83 = por %p81, %p82
      %s85 = sadd.s32 %s84, 1
      %p88 = scmp.eq.s32.totalorder %s24, 1
      %p89 = scmp.ne.s32.totalorder %s84, %s86
      %p90 = scmp.eq.s32.totalorder %s24, 0
      %p91 = por %p89, %p90
      %p92 = scmp.ne.s32.totalorder %s84, %s86
      %p93 = scmp.eq.s32.totalorder %s29, 1
      %p94 = por %p92, %p93
      %p95 = scmp.ne.s32.totalorder %s86, %s87
      %p96 = scmp.eq.s32.totalorder %s29, 0
      %p97 = por %p95, %p96
      %p98 = scmp.ne.s32.totalorder %s86, %s87
      %p99 = scmp.eq.s32.totalorder %s30, 1
      %p100 = por %p98, %p99
      %p102 = scmp.ne.s32.totalorder %s87, %s101
      %p103 = scmp.eq.s32.totalorder %s30, 0
      %p104 = por %p102, %p103
      %s106 = sadd.s32 %s105, 1
      %p109 = scmp.eq.s32.totalorder %s24, 1
      %p110 = scmp.ne.s32.totalorder %s105, %s107
      %p111 = scmp.eq.s32.totalorder %s24, 0
      %p112 = por %p110, %p111
      %p113 = scmp.ne.s32.totalorder %s105, %s107
      %p114 = scmp.eq.s32.totalorder %s29, 1
      %p115 = por %p113, %p114
      %p116 = scmp.ne.s32.totalorder %s107, %s108
      %p117 = scmp.eq.s32.totalorder %s29, 0
      %p118 = por %p116, %p117
      %p119 = scmp.ne.s32.totalorder %s107, %s108
      %p120 = scmp.eq.s32.totalorder %s30, 1
      %p121 = por %p119, %p120
      %p123 = scmp.ne.s32.totalorder %s108, %s122
      %p124 = scmp.eq.s32.totalorder %s30, 0
      %p125 = por %p123, %p124
      %s127 = sadd.s32 %s126, 1
      %p130 = scmp.eq.s32.totalorder %s24, 1
      %p131 = scmp.ne.s32.totalorder %s126, %s128
      %p132 = scmp.eq.s32.totalorder %s24, 0
      %p133 = por %p131, %p132
      %p134 = scmp.ne.s32.totalorder %s126, %s128
      %p135 = scmp.eq.s32.totalorder %s29, 1
      %p136 = por %p134, %p135
      %p137 = scmp.ne.s32.totalorder %s128, %s129
      %p138 = scmp.eq.s32.totalorder %s29, 0
      %p139 = por %p137, %p138
      %p140 = scmp.ne.s32.totalorder %s128, %s129
      %p141 = scmp.eq.s32.totalorder %s30, 1
      %p142 = por %p140, %p141
      %p144 = scmp.ne.s32.totalorder %s129, %s143
      %p145 = scmp.eq.s32.totalorder %s30, 0
      %p146 = por %p144, %p145
      %s148 = sadd.s32 %s147, 1
      %p151 = scmp.eq.s32.totalorder %s24, 1
      %p152 = scmp.ne.s32.totalorder %s147, %s149
      %p153 = scmp.eq.s32.totalorder %s24, 0
      %p154 = por %p152, %p153
      %p155 = scmp.ne.s32.totalorder %s147, %s149
      %p156 = scmp.eq.s32.totalorder %s29, 1
      %p157 = por %p155, %p156
      %p158 = scmp.ne.s32.totalorder %s149, %s150
      %p159 = scmp.eq.s32.totalorder %s29, 0
      %p160 = por %p158, %p159
      %p161 = scmp.ne.s32.totalorder %s149, %s150
      %p162 = scmp.eq.s32.totalorder %s30, 1
      %p163 = por %p161, %p162
      %p165 = scmp.ne.s32.totalorder %s150, %s164
      %p166 = scmp.eq.s32.totalorder %s30, 0
      %p167 = por %p165, %p166
      %s169 = sadd.s32 %s168, 1
      %p172 = scmp.eq.s32.totalorder %s24, 1
      %p173 = scmp.ne.s32.totalorder %s168, %s170
      %p174 = scmp.eq.s32.totalorder %s24, 0
      %p175 = por %p173, %p174
      %p176 = scmp.ne.s32.totalorder %s168, %s170
      %p177 = scmp.eq.s32.totalorder %s29, 1
      %p178 = por %p176, %p177
      %p179 = scmp.ne.s32.totalorder %s170, %s171
      %p180 = scmp.eq.s32.totalorder %s29, 0
      %p181 = por %p179, %p180
      %p182 = scmp.ne.s32.totalorder %s170, %s171
      %p183 = scmp.eq.s32.totalorder %s30, 1
      %p184 = por %p182, %p183
      %p186 = scmp.ne.s32.totalorder %s171, %s185
      %p187 = scmp.eq.s32.totalorder %s30, 0
      %p188 = por %p186, %p187
      %s190 = sadd.s32 %s189, 1
      %p193 = scmp.eq.s32.totalorder %s24, 1
      %p194 = scmp.ne.s32.totalorder %s189, %s191
      %p195 = scmp.eq.s32.totalorder %s24, 0
      %p196 = por %p194, %p195
      %p197 = scmp.ne.s32.totalorder %s189, %s191
      %p198 = scmp.eq.s32.totalorder %s29, 1
      %p199 = por %p197, %p198
      %p200 = scmp.ne.s32.totalorder %s191, %s192
      %p201 = scmp.eq.s32.totalorder %s29, 0
      %p202 = por %p200, %p201
      %p203 = scmp.ne.s32.totalorder %s191, %s192
      %p204 = scmp.eq.s32.totalorder %s30, 1
      %p205 = por %p203, %p204
      %p207 = scmp.ne.s32.totalorder %s192, %s206
      %p208 = scmp.eq.s32.totalorder %s30, 0
      %p209 = por %p207, %p208
      %s210 = ssub.s32 %s24, %s31
      %p211 = scmp.eq.s32.totalorder %s210, 0
      %s213 = sadd.s32 %s212, 1
      %s214 = scalar_select %p211, %s212, %s213
      %p217 = pneg %p211
      %p218 = scmp.eq.s32.totalorder %s24, 1
      %p219 = por %p217, %p218
      %p220 = scmp.ne.s32.totalorder %s212, %s215
      %p221 = scmp.eq.s32.totalorder %s24, 0
      %p222 = por %p220, %p221
      %p223 = scmp.ne.s32.totalorder %s212, %s215
      %p224 = scmp.eq.s32.totalorder %s29, 1
      %p225 = por %p223, %p224
      %p226 = scmp.ne.s32.totalorder %s215, %s216
      %p227 = scmp.eq.s32.totalorder %s29, 0
      %p228 = por %p226, %p227
      %p229 = scmp.ne.s32.totalorder %s215, %s216
      %p230 = scmp.eq.s32.totalorder %s30, 1
      %p231 = por %p229, %p230
      %p233 = scmp.ne.s32.totalorder %s216, %s232
      %p234 = scmp.eq.s32.totalorder %s30, 0
      %p235 = por %p233, %p234
      %p236 = scmp.le.s32.totalorder 1, %s24
      %p237 = scmp.lt.s32.totalorder %s24, 3
      %p238 = pnand %p236, %p237
      %p239 = pneg %p238
      // Predicated region
      $region9: #{tpu_custom_call.1} parent=5 // pred_check
        _
      $region10: #{tpu_custom_call.1} parent=5 // pred_check_branch
        %241 = sbr.rel (%p238) target = $region12
      $region11: #{tpu_custom_call.1} parent=5 // pred_region
        %s242 = ssub.s32 %s24, 1
        // Predicated region
        $region13: #{tpu_custom_call.1} parent=11 // pred_check
          %p243 = pneg %p97
        $region14: #{tpu_custom_call.1} parent=11 // pred_check_branch
          %245 = sbr.rel (%p243) target = $region16
        $region15: #{tpu_custom_call.1} parent=11 // pred_region
          %247 = vsyncadd [#allocation6], 0
          %s248 = sshll.u32 %s2, 4
          %s249 = int_to_ptr.hbm [resolvable:$true] %s248
          %s250 = sshll.u32 [#allocation7], 4
          %s251 = int_to_ptr.vmem [resolvable:$true] %s250
          %256 = dma.hbm_to_vmem [thread:$0]  %s249, 2048, %s251, [#allocation6], 128, 128, 8
        $region16: #{tpu_custom_call.1} parent=11 // pred_fallthru
          _
        // Predicated region
        $region17: #{tpu_custom_call.1} parent=11 // pred_check
          %p257 = pneg %p118
        $region18: #{tpu_custom_call.1} parent=11 // pred_check_branch
          %259 = sbr.rel (%p257) target = $region20
        $region19: #{tpu_custom_call.1} parent=11 // pred_region
          _
        $region20: #{tpu_custom_call.1} parent=11 // pred_fallthru
          _
        // Predicated region
        $region21: #{tpu_custom_call.1} parent=11 // pred_check
          %p260 = pneg %p139
        $region22: #{tpu_custom_call.1} parent=11 // pred_check_branch
          %262 = sbr.rel (%p260) target = $region24
        $region23: #{tpu_custom_call.1} parent=11 // pred_region
          %264 = vsyncadd [#allocation9], 0
          %s265 = sshll.u32 %s4, 4
          %s266 = int_to_ptr.hbm [resolvable:$true] %s265
          %s267 = sshll.u32 [#allocation8], 4
          %s268 = int_to_ptr.vmem [resolvable:$true] %s267
          %273 = dma.hbm_to_vmem [thread:$0]  %s266, 4096, %s268, [#allocation9], 256, 256, 16
        $region24: #{tpu_custom_call.1} parent=11 // pred_fallthru
          _
        // Predicated region
        $region25: #{tpu_custom_call.1} parent=11 // pred_check
          %p274 = pneg %p160
        $region26: #{tpu_custom_call.1} parent=11 // pred_check_branch
          %276 = sbr.rel (%p274) target = $region28
        $region27: #{tpu_custom_call.1} parent=11 // pred_region
          _
        $region28: #{tpu_custom_call.1} parent=11 // pred_fallthru
          _
        // Predicated region
        $region29: #{tpu_custom_call.1} parent=11 // pred_check
          %p277 = pneg %p181
        $region30: #{tpu_custom_call.1} parent=11 // pred_check_branch
          %279 = sbr.rel (%p277) target = $region32
        $region31: #{tpu_custom_call.1} parent=11 // pred_region
          %281 = vsyncadd [#allocation9], 0
          %s282 = sshll.u32 %s6, 4
          %s283 = int_to_ptr.hbm [resolvable:$true] %s282
          %s284 = sshll.u32 [#allocation10], 4
          %s285 = int_to_ptr.vmem [resolvable:$true] %s284
          %290 = dma.hbm_to_vmem [thread:$0]  %s283, 2048, %s285, [#allocation9], 128, 128, 8
        $region32: #{tpu_custom_call.1} parent=11 // pred_fallthru
          _
        // Predicated region
        $region33: #{tpu_custom_call.1} parent=11 // pred_check
          %p291 = pneg %p202
        $region34: #{tpu_custom_call.1} parent=11 // pred_check_branch
          %293 = sbr.rel (%p291) target = $region36
        $region35: #{tpu_custom_call.1} parent=11 // pred_region
          _
        $region36: #{tpu_custom_call.1} parent=11 // pred_fallthru
          _
      $region12: #{tpu_custom_call.1} parent=5 // pred_fallthru
        _
      %p294 = scmp.lt.s32.totalorder %s24, 2
      // Predicated region
      $region37: #{tpu_custom_call.1} parent=5 // pred_check
        %p295 = pneg %p294
      $region38: #{tpu_custom_call.1} parent=5 // pred_check_branch
        %297 = sbr.rel (%p295) target = $region40
      $region39: #{tpu_custom_call.1} parent=5 // pred_region
        // Predicated region
        $region41: #{tpu_custom_call.1} parent=39 // pred_check
          %p298 = pneg %p44
        $region42: #{tpu_custom_call.1} parent=39 // pred_check_branch
          %300 = sbr.rel (%p298) target = $region44
        $region43: #{tpu_custom_call.1} parent=39 // pred_region
          %s301 = sand.u32 %s34, 1
          %s302 = scalar_lea.sflag [#allocation3], %s301
          %s303 = sand.u32 %s34, 1
          %s304 = smul.addr %s303, 24
          %s305 = scalar_lea.vmem [#allocation2], %s304
          %s306 = smul.u32 3, %s24
          %308 = vsyncadd %s302, 0
          %s309 = smul.addr %s306, 8
          %s310 = scalar_lea.hbm %s0, %s309
          %s311 = sshll.u32 %s310, 4
          %s312 = int_to_ptr.hbm [resolvable:$true] %s311
          %s313 = sshll.u32 %s305, 4
          %s314 = int_to_ptr.vmem [resolvable:$true] %s313
          %319 = dma.hbm_to_vmem [thread:$0]  %s312, 384, %s314, %s302, 128, 128, 8
        $region44: #{tpu_custom_call.1} parent=39 // pred_fallthru
          _
        // Predicated region
        $region45: #{tpu_custom_call.1} parent=39 // pred_check
          %p320 = pneg %p70
        $region46: #{tpu_custom_call.1} parent=39 // pred_check_branch
          %322 = sbr.rel (%p320) target = $region48
        $region47: #{tpu_custom_call.1} parent=39 // pred_region
          %s323 = sand.u32 %s24, 1
          %s324 = scalar_lea.sflag [#allocation6], %s323
          %s325 = sand.u32 %s60, 1
          %s326 = smul.addr %s325, 48
          %s327 = scalar_lea.vmem [#allocation5], %s326
          %s328 = smul.u32 3, %s24
          %330 = vsyncadd %s324, 0
          %s331 = smul.addr %s328, 2
          %s332 = smul.addr %s331, 8
          %s333 = scalar_lea.hbm %s1, %s332
          %s334 = sshll.u32 %s333, 4
          %s335 = int_to_ptr.hbm [resolvable:$true] %s334
          %s336 = sshll.u32 %s327, 4
          %s337 = int_to_ptr.vmem [resolvable:$true] %s336
          %342 = dma.hbm_to_vmem [thread:$0]  %s335, 768, %s337, %s324, 128, 128, 8
        $region48: #{tpu_custom_call.1} parent=39 // pred_fallthru
          _
      $region40: #{tpu_custom_call.1} parent=5 // pred_fallthru
        _
      %p343 = scmp.le.s32.totalorder 1, %s24
      %p344 = scmp.lt.s32.totalorder %s24, 3
      %p345 = pnand %p343, %p344
      %p346 = pneg %p345
      // Predicated region
      $region49: #{tpu_custom_call.1} parent=5 // pred_check
        _
      $region50: #{tpu_custom_call.1} parent=5 // pred_check_branch
        %348 = sbr.rel (%p345) target = $region52
      $region51: #{tpu_custom_call.1} parent=5 // pred_region
        %s349 = ssub.s32 %s24, 1
        %s350 = sand.u32 %s37, 1
        %s351 = scalar_lea.sflag [#allocation3], %s350
        %s352 = sand.u32 %s37, 1
        %s353 = smul.addr %s352, 24
        %s354 = scalar_lea.vmem [#allocation2], %s353
        // Predicated region
        $region53: #{tpu_custom_call.1} parent=51 // pred_check
          %p355 = pneg %p50
        $region54: #{tpu_custom_call.1} parent=51 // pred_check_branch
          %357 = sbr.rel (%p355) target = $region56
        $region55: #{tpu_custom_call.1} parent=51 // pred_region
          %359 = dma.done %s351, 384
        $region56: #{tpu_custom_call.1} parent=51 // pred_fallthru
          _
        %s360 = sand.u32 %s29, 1
        %s361 = scalar_lea.sflag [#allocation6], %s360
        %s362 = sand.u32 %s63, 1
        %s363 = smul.addr %s362, 48
        %s364 = scalar_lea.vmem [#allocation5], %s363
        // Predicated region
        $region57: #{tpu_custom_call.1} parent=51 // pred_check
          %p365 = pneg %p76
        $region58: #{tpu_custom_call.1} parent=51 // pred_check_branch
          %367 = sbr.rel (%p365) target = $region60
        $region59: #{tpu_custom_call.1} parent=51 // pred_region
          %369 = dma.done %s361, 768
        $region60: #{tpu_custom_call.1} parent=51 // pred_fallthru
          _
        // Predicated region
        $region61: #{tpu_custom_call.1} parent=51 // pred_check
          %p370 = pneg %p97
        $region62: #{tpu_custom_call.1} parent=51 // pred_check_branch
          %372 = sbr.rel (%p370) target = $region64
        $region63: #{tpu_custom_call.1} parent=51 // pred_region
          %374 = dma.done [#allocation6], 2048
        $region64: #{tpu_custom_call.1} parent=51 // pred_fallthru
          _
        // Predicated region
        $region65: #{tpu_custom_call.1} parent=51 // pred_check
          %p375 = pneg %p139
        $region66: #{tpu_custom_call.1} parent=51 // pred_check_branch
          %377 = sbr.rel (%p375) target = $region68
        $region67: #{tpu_custom_call.1} parent=51 // pred_region
          %379 = dma.done [#allocation9], 4096
        $region68: #{tpu_custom_call.1} parent=51 // pred_fallthru
          _
        // Predicated region
        $region69: #{tpu_custom_call.1} parent=51 // pred_check
          %p380 = pneg %p181
        $region70: #{tpu_custom_call.1} parent=51 // pred_check_branch
          %382 = sbr.rel (%p380) target = $region72
        $region71: #{tpu_custom_call.1} parent=51 // pred_region
          %384 = dma.done [#allocation9], 2048
        $region72: #{tpu_custom_call.1} parent=51 // pred_fallthru
          _
        %s385 = sand.u32 %s37, 1
        %s386 = scalar_lea.sflag [#allocation3], %s385
        %s387 = sand.u32 %s37, 1
        %s388 = smul.addr %s387, 24
        %s389 = scalar_lea.vmem [#allocation2], %s388
        %p390 = pneg %p50
        %p391 = pneg %p47
        %s392 = sand.u32 %s29, 1
        %s393 = scalar_lea.sflag [#allocation6], %s392
        %s394 = sand.u32 %s63, 1
        %s395 = smul.addr %s394, 48
        %s396 = scalar_lea.vmem [#allocation5], %s395
        %p397 = pneg %p76
        %p398 = pneg %p73
        %p399 = pneg %p97
        %p400 = pneg %p94
        %p401 = pneg %p118
        %p402 = pneg %p115
        %p403 = pneg %p139
        %p404 = pneg %p136
        %p405 = pneg %p160
        %p406 = pneg %p157
        %p407 = pneg %p181
        %p408 = pneg %p178
        %p409 = pneg %p202
        %p410 = pneg %p199
        %p411 = pneg %p228
        %p412 = pneg %p225
        %s413 = sand.u32 %s215, 1
        %s414 = scalar_lea.sflag [#allocation4], %s413
        %s415 = sand.u32 %s215, 1
        %s416 = smul.addr %s415, 24
        %s417 = scalar_lea.vmem [#allocation11], %s416
        %s418 = smul.u32 3, %s29
        %s419 = smul.u32 3, %s29
        %s420 = smul.u32 3, %s29
        %v421 = vld [vmem:[%s354] sm:$0xff]
        %v422 = vld [vmem:[%s354 + $0x8] sm:$0xff]
        %v423 = vld [vmem:[%s354 + $0x10] sm:$0xff]
        %v424 = vld [vmem:[%s364] sm:$0xff]
        %v425 = vld [vmem:[%s364 + $0x8] sm:$0xff]
        %v426 = vld [vmem:[%s364 + $0x10] sm:$0xff]
        %v427 = vld [vmem:[%s364 + $0x18] sm:$0xff]
        %v428 = vld [vmem:[%s364 + $0x20] sm:$0xff]
        %v429 = vld [vmem:[%s364 + $0x28] sm:$0xff]
        %v430 = vld [vmem:[#allocation7] sm:$0xff]
        %v431 = vld [vmem:[#allocation7 + $0x8] sm:$0xff]
        %v432 = vld [vmem:[#allocation7 + $0x10] sm:$0xff]
        %v433 = vld [vmem:[#allocation7 + $0x18] sm:$0xff]
        %v434 = vld [vmem:[#allocation7 + $0x20] sm:$0xff]
        %v435 = vld [vmem:[#allocation7 + $0x28] sm:$0xff]
        %v436 = vld [vmem:[#allocation7 + $0x30] sm:$0xff]
        %v437 = vld [vmem:[#allocation7 + $0x38] sm:$0xff]
        %v438 = vld [vmem:[#allocation7 + $0x40] sm:$0xff]
        %v439 = vld [vmem:[#allocation7 + $0x48] sm:$0xff]
        %v440 = vld [vmem:[#allocation7 + $0x50] sm:$0xff]
        %v441 = vld [vmem:[#allocation7 + $0x58] sm:$0xff]
        %v442 = vld [vmem:[#allocation7 + $0x60] sm:$0xff]
        %v443 = vld [vmem:[#allocation7 + $0x68] sm:$0xff]
        %v444 = vld [vmem:[#allocation7 + $0x70] sm:$0xff]
        %v445 = vld [vmem:[#allocation7 + $0x78] sm:$0xff]
        %v446 = vld [vmem:[%s3] sm:$0x1]
        %v448 = vperm.slane %v446, 0
        %450 = vmatpush.msra.mxu0 %v445
        %451 = vmatpush.msra.mxu0 %v444
        %452 = vmatpush.msra.mxu0 %v443
        %453 = vmatpush.msra.mxu0 %v442
        %454 = vmatpush.msra.mxu0 %v441
        %455 = vmatpush.msra.mxu0 %v440
        %456 = vmatpush.msra.mxu0 %v439
        %457 = vmatpush.msra.mxu0 %v438
        %458 = vmatpush.msra.mxu0 %v437
        %459 = vmatpush.msra.mxu0 %v436
        %460 = vmatpush.msra.mxu0 %v435
        %461 = vmatpush.msra.mxu0 %v434
        %462 = vmatpush.msra.mxu0 %v433
        %463 = vmatpush.msra.mxu0 %v432
        %464 = vmatpush.msra.mxu0 %v431
        %465 = vmatpush.msra.mxu0 %v430
        %466 = vmatmul.f32.gmra.mxu0 %v421
        %v467 = vpop.f32.mrf.mxu0
        %v468 = vadd.f32 %v448, %v467
        %469 = vmatmul.f32.gmra.mxu0 %v422
        %v470 = vpop.f32.mrf.mxu0
        %v471 = vadd.f32 %v448, %v470
        %472 = vmatmul.f32.gmra.mxu0 %v423
        %v473 = vpop.f32.mrf.mxu0
        %v474 = vadd.f32 %v448, %v473
        %475 = vdwg.mxu0
        %v476 = vld [vmem:[#allocation8] sm:$0xff]
        %v477 = vld [vmem:[#allocation8 + $0x8] sm:$0xff]
        %v478 = vld [vmem:[#allocation8 + $0x10] sm:$0xff]
        %v479 = vld [vmem:[#allocation8 + $0x18] sm:$0xff]
        %v480 = vld [vmem:[#allocation8 + $0x20] sm:$0xff]
        %v481 = vld [vmem:[#allocation8 + $0x28] sm:$0xff]
        %v482 = vld [vmem:[#allocation8 + $0x30] sm:$0xff]
        %v483 = vld [vmem:[#allocation8 + $0x38] sm:$0xff]
        %v484 = vld [vmem:[#allocation8 + $0x40] sm:$0xff]
        %v485 = vld [vmem:[#allocation8 + $0x48] sm:$0xff]
        %v486 = vld [vmem:[#allocation8 + $0x50] sm:$0xff]
        %v487 = vld [vmem:[#allocation8 + $0x58] sm:$0xff]
        %v488 = vld [vmem:[#allocation8 + $0x60] sm:$0xff]
        %v489 = vld [vmem:[#allocation8 + $0x68] sm:$0xff]
        %v490 = vld [vmem:[#allocation8 + $0x70] sm:$0xff]
        %v491 = vld [vmem:[#allocation8 + $0x78] sm:$0xff]
        %v492 = vld [vmem:[#allocation8 + $0x80] sm:$0xff]
        %v493 = vld [vmem:[#allocation8 + $0x88] sm:$0xff]
        %v494 = vld [vmem:[#allocation8 + $0x90] sm:$0xff]
        %v495 = vld [vmem:[#allocation8 + $0x98] sm:$0xff]
        %v496 = vld [vmem:[#allocation8 + $0xa0] sm:$0xff]
        %v497 = vld [vmem:[#allocation8 + $0xa8] sm:$0xff]
        %v498 = vld [vmem:[#allocation8 + $0xb0] sm:$0xff]
        %v499 = vld [vmem:[#allocation8 + $0xb8] sm:$0xff]
        %v500 = vld [vmem:[#allocation8 + $0xc0] sm:$0xff]
        %v501 = vld [vmem:[#allocation8 + $0xc8] sm:$0xff]
        %v502 = vld [vmem:[#allocation8 + $0xd0] sm:$0xff]
        %v503 = vld [vmem:[#allocation8 + $0xd8] sm:$0xff]
        %v504 = vld [vmem:[#allocation8 + $0xe0] sm:$0xff]
        %v505 = vld [vmem:[#allocation8 + $0xe8] sm:$0xff]
        %v506 = vld [vmem:[#allocation8 + $0xf0] sm:$0xff]
        %v507 = vld [vmem:[#allocation8 + $0xf8] sm:$0xff]
        %v508 = vld [vmem:[%s5] sm:$0x3]
        %v510 = vperm.slane %v508, 0
        %v511 = vperm.slane %v508, 1
        %514 = vmatpush.msra.mxu0 %v506
        %515 = vmatpush.msra.mxu0 %v504
        %516 = vmatpush.msra.mxu0 %v502
        %517 = vmatpush.msra.mxu0 %v500
        %518 = vmatpush.msra.mxu0 %v498
        %519 = vmatpush.msra.mxu0 %v496
        %520 = vmatpush.msra.mxu0 %v494
        %521 = vmatpush.msra.mxu0 %v492
        %522 = vmatpush.msra.mxu0 %v490
        %523 = vmatpush.msra.mxu0 %v488
        %524 = vmatpush.msra.mxu0 %v486
        %525 = vmatpush.msra.mxu0 %v484
        %526 = vmatpush.msra.mxu0 %v482
        %527 = vmatpush.msra.mxu0 %v480
        %528 = vmatpush.msra.mxu0 %v478
        %529 = vmatpush.msra.mxu0 %v476
        %530 = vmatmul.f32.gmra.mxu0 %v424
        %v531 = vpop.f32.mrf.mxu0
        %v532 = vadd.f32 %v510, %v531
        %533 = vmatmul.f32.gmra.mxu0 %v425
        %v534 = vpop.f32.mrf.mxu0
        %v535 = vadd.f32 %v510, %v534
        %536 = vmatmul.f32.gmra.mxu0 %v426
        %v537 = vpop.f32.mrf.mxu0
        %v538 = vadd.f32 %v510, %v537
        %539 = vmatmul.f32.gmra.mxu0 %v427
        %v540 = vpop.f32.mrf.mxu0
        %v541 = vadd.f32 %v510, %v540
        %542 = vmatmul.f32.gmra.mxu0 %v428
        %v543 = vpop.f32.mrf.mxu0
        %v544 = vadd.f32 %v510, %v543
        %545 = vmatmul.f32.gmra.mxu0 %v429
        %v546 = vpop.f32.mrf.mxu0
        %v547 = vadd.f32 %v510, %v546
        %548 = vdwg.mxu0
        %549 = vmatpush.msra.mxu0 %v507
        %550 = vmatpush.msra.mxu0 %v505
        %551 = vmatpush.msra.mxu0 %v503
        %552 = vmatpush.msra.mxu0 %v501
        %553 = vmatpush.msra.mxu0 %v499
        %554 = vmatpush.msra.mxu0 %v497
        %555 = vmatpush.msra.mxu0 %v495
        %556 = vmatpush.msra.mxu0 %v493
        %557 = vmatpush.msra.mxu0 %v491
        %558 = vmatpush.msra.mxu0 %v489
        %559 = vmatpush.msra.mxu0 %v487
        %560 = vmatpush.msra.mxu0 %v485
        %561 = vmatpush.msra.mxu0 %v483
        %562 = vmatpush.msra.mxu0 %v481
        %563 = vmatpush.msra.mxu0 %v479
        %564 = vmatpush.msra.mxu0 %v477
        %565 = vmatmul.f32.gmra.mxu0 %v424
        %v566 = vpop.f32.mrf.mxu0
        %v567 = vadd.f32 %v511, %v566
        %568 = vmatmul.f32.gmra.mxu0 %v425
        %v569 = vpop.f32.mrf.mxu0
        %v570 = vadd.f32 %v511, %v569
        %571 = vmatmul.f32.gmra.mxu0 %v426
        %v572 = vpop.f32.mrf.mxu0
        %v573 = vadd.f32 %v511, %v572
        %574 = vmatmul.f32.gmra.mxu0 %v427
        %v575 = vpop.f32.mrf.mxu0
        %v576 = vadd.f32 %v511, %v575
        %577 = vmatmul.f32.gmra.mxu0 %v428
        %v578 = vpop.f32.mrf.mxu0
        %v579 = vadd.f32 %v511, %v578
        %580 = vmatmul.f32.gmra.mxu0 %v429
        %v581 = vpop.f32.mrf.mxu0
        %v582 = vadd.f32 %v511, %v581
        %583 = vdwg.mxu0
        %587 = vrot.lane.b32.xlu0 %v468, 96
        %v588 = vpop.permute.xlu0 %587
        %589 = vrot.lane.b32.xlu0 %v471, 96
        %v590 = vpop.permute.xlu0 %589
        %591 = vrot.lane.b32.xlu0 %v474, 96
        %v592 = vpop.permute.xlu0 %591
        %593 = vrot.lane.b32.xlu0 %v468, 64
        %v594 = vpop.permute.xlu0 %593
        %595 = vrot.lane.b32.xlu0 %v471, 64
        %v596 = vpop.permute.xlu0 %595
        %597 = vrot.lane.b32.xlu0 %v474, 64
        %v598 = vpop.permute.xlu0 %597
        %599 = vrot.lane.b32.xlu0 %v468, 32
        %v600 = vpop.permute.xlu0 %599
        %601 = vrot.lane.b32.xlu0 %v471, 32
        %v602 = vpop.permute.xlu0 %601
        %603 = vrot.lane.b32.xlu0 %v474, 32
        %v604 = vpop.permute.xlu0 %603
        %611 = vrot.lane.b32.xlu0 %v532, 96
        %v612 = vpop.permute.xlu0 %611
        %613 = vrot.lane.b32.xlu0 %v535, 96
        %v614 = vpop.permute.xlu0 %613
        %615 = vrot.lane.b32.xlu0 %v538, 96
        %v616 = vpop.permute.xlu0 %615
        %617 = vrot.lane.b32.xlu0 %v541, 96
        %v618 = vpop.permute.xlu0 %617
        %619 = vrot.lane.b32.xlu0 %v544, 96
        %v620 = vpop.permute.xlu0 %619
        %621 = vrot.lane.b32.xlu0 %v547, 96
        %v622 = vpop.permute.xlu0 %621
        %623 = vrot.lane.b32.xlu0 %v532, 64
        %v624 = vpop.permute.xlu0 %623
        %625 = vrot.lane.b32.xlu0 %v535, 64
        %v626 = vpop.permute.xlu0 %625
        %627 = vrot.lane.b32.xlu0 %v538, 64
        %v628 = vpop.permute.xlu0 %627
        %629 = vrot.lane.b32.xlu0 %v541, 64
        %v630 = vpop.permute.xlu0 %629
        %631 = vrot.lane.b32.xlu0 %v544, 64
        %v632 = vpop.permute.xlu0 %631
        %633 = vrot.lane.b32.xlu0 %v547, 64
        %v634 = vpop.permute.xlu0 %633
        %635 = vrot.lane.b32.xlu0 %v532, 32
        %v636 = vpop.permute.xlu0 %635
        %637 = vrot.lane.b32.xlu0 %v535, 32
        %v638 = vpop.permute.xlu0 %637
        %639 = vrot.lane.b32.xlu0 %v538, 32
        %v640 = vpop.permute.xlu0 %639
        %641 = vrot.lane.b32.xlu0 %v541, 32
        %v642 = vpop.permute.xlu0 %641
        %643 = vrot.lane.b32.xlu0 %v544, 32
        %v644 = vpop.permute.xlu0 %643
        %645 = vrot.lane.b32.xlu0 %v547, 32
        %v646 = vpop.permute.xlu0 %645
        %653 = vrot.lane.b32.xlu0 %v567, 96
        %v654 = vpop.permute.xlu0 %653
        %655 = vrot.lane.b32.xlu0 %v570, 96
        %v656 = vpop.permute.xlu0 %655
        %657 = vrot.lane.b32.xlu0 %v573, 96
        %v658 = vpop.permute.xlu0 %657
        %659 = vrot.lane.b32.xlu0 %v576, 96
        %v660 = vpop.permute.xlu0 %659
        %661 = vrot.lane.b32.xlu0 %v579, 96
        %v662 = vpop.permute.xlu0 %661
        %663 = vrot.lane.b32.xlu0 %v582, 96
        %v664 = vpop.permute.xlu0 %663
        %671 = vrot.lane.b32.xlu0 %v567, 64
        %v672 = vpop.permute.xlu0 %671
        %673 = vrot.lane.b32.xlu0 %v570, 64
        %v674 = vpop.permute.xlu0 %673
        %675 = vrot.lane.b32.xlu0 %v573, 64
        %v676 = vpop.permute.xlu0 %675
        %677 = vrot.lane.b32.xlu0 %v576, 64
        %v678 = vpop.permute.xlu0 %677
        %679 = vrot.lane.b32.xlu0 %v579, 64
        %v680 = vpop.permute.xlu0 %679
        %681 = vrot.lane.b32.xlu0 %v582, 64
        %v682 = vpop.permute.xlu0 %681
        %689 = vrot.lane.b32.xlu0 %v567, 32
        %v690 = vpop.permute.xlu0 %689
        %691 = vrot.lane.b32.xlu0 %v570, 32
        %v692 = vpop.permute.xlu0 %691
        %693 = vrot.lane.b32.xlu0 %v573, 32
        %v694 = vpop.permute.xlu0 %693
        %695 = vrot.lane.b32.xlu0 %v576, 32
        %v696 = vpop.permute.xlu0 %695
        %697 = vrot.lane.b32.xlu0 %v579, 32
        %v698 = vpop.permute.xlu0 %697
        %699 = vrot.lane.b32.xlu0 %v582, 32
        %v700 = vpop.permute.xlu0 %699
        %vm707 = vcmask 261120
        %v708 = vsel %vm707, %v468, 0
        %v710 = vsel %vm707, %v532, 0
        %v712 = vsel %vm707, %v535, 0
        %714 = vmatpush.xpose.msra.mxu0 0.0
        %715 = vmatpush.xpose.msra.mxu0 0.0
        %716 = vmatpush.xpose.msra.mxu0 0.0
        %717 = vmatpush.xpose.msra.mxu0 0.0
        %718 = vmatpush.xpose.msra.mxu0 0.0
        %719 = vmatpush.xpose.msra.mxu0 0.0
        %720 = vmatpush.xpose.msra.mxu0 0.0
        %721 = vmatpush.xpose.msra.mxu0 0.0
        %722 = vmatpush.xpose.msra.mxu0 0.0
        %723 = vmatpush.xpose.msra.mxu0 0.0
        %724 = vmatpush.xpose.msra.mxu0 0.0
        %725 = vmatpush.xpose.msra.mxu0 0.0
        %726 = vmatpush.xpose.msra.mxu0 0.0
        %727 = vmatpush.xpose.msra.mxu0 0.0
        %728 = vmatpush.xpose.msra.mxu0 %v712
        %729 = vmatpush.xpose.msra.mxu0 %v710
        %730 = vmatmul.f32.gmra.mxu0 %v708
        %v731 = vpop.f32.mrf.mxu0
        %v732 = vadd.f32 0.0, %v731
        %733 = vdwg.mxu0
        %v734 = vsel %vm707, %v471, 0
        %v736 = vsel %vm707, %v538, 0
        %v738 = vsel %vm707, %v541, 0
        %740 = vmatpush.xpose.msra.mxu0 0.0
        %741 = vmatpush.xpose.msra.mxu0 0.0
        %742 = vmatpush.xpose.msra.mxu0 0.0
        %743 = vmatpush.xpose.msra.mxu0 0.0
        %744 = vmatpush.xpose.msra.mxu0 0.0
        %745 = vmatpush.xpose.msra.mxu0 0.0
        %746 = vmatpush.xpose.msra.mxu0 0.0
        %747 = vmatpush.xpose.msra.mxu0 0.0
        %748 = vmatpush.xpose.msra.mxu0 0.0
        %749 = vmatpush.xpose.msra.mxu0 0.0
        %750 = vmatpush.xpose.msra.mxu0 0.0
        %751 = vmatpush.xpose.msra.mxu0 0.0
        %752 = vmatpush.xpose.msra.mxu0 0.0
        %753 = vmatpush.xpose.msra.mxu0 0.0
        %754 = vmatpush.xpose.msra.mxu0 %v738
        %755 = vmatpush.xpose.msra.mxu0 %v736
        %756 = vmatmul.f32.gmra.mxu0 %v734
        %v757 = vpop.f32.mrf.mxu0
        %v758 = vadd.f32 0.0, %v757
        %759 = vdwg.mxu0
        %v760 = vsel %vm707, %v474, 0
        %v762 = vsel %vm707, %v544, 0
        %v764 = vsel %vm707, %v547, 0
        %766 = vmatpush.xpose.msra.mxu0 0.0
        %767 = vmatpush.xpose.msra.mxu0 0.0
        %768 = vmatpush.xpose.msra.mxu0 0.0
        %769 = vmatpush.xpose.msra.mxu0 0.0
        %770 = vmatpush.xpose.msra.mxu0 0.0
        %771 = vmatpush.xpose.msra.mxu0 0.0
        %772 = vmatpush.xpose.msra.mxu0 0.0
        %773 = vmatpush.xpose.msra.mxu0 0.0
        %774 = vmatpush.xpose.msra.mxu0 0.0
        %775 = vmatpush.xpose.msra.mxu0 0.0
        %776 = vmatpush.xpose.msra.mxu0 0.0
        %777 = vmatpush.xpose.msra.mxu0 0.0
        %778 = vmatpush.xpose.msra.mxu0 0.0
        %779 = vmatpush.xpose.msra.mxu0 0.0
        %780 = vmatpush.xpose.msra.mxu0 %v764
        %781 = vmatpush.xpose.msra.mxu0 %v762
        %782 = vmatmul.f32.gmra.mxu0 %v760
        %v783 = vpop.f32.mrf.mxu0
        %v784 = vadd.f32 0.0, %v783
        %785 = vdwg.mxu0
        %v786 = vsel %vm707, %v588, 0
        %v788 = vsel %vm707, %v612, 0
        %v790 = vsel %vm707, %v614, 0
        %792 = vmatpush.xpose.msra.mxu0 0.0
        %793 = vmatpush.xpose.msra.mxu0 0.0
        %794 = vmatpush.xpose.msra.mxu0 0.0
        %795 = vmatpush.xpose.msra.mxu0 0.0
        %796 = vmatpush.xpose.msra.mxu0 0.0
        %797 = vmatpush.xpose.msra.mxu0 0.0
        %798 = vmatpush.xpose.msra.mxu0 0.0
        %799 = vmatpush.xpose.msra.mxu0 0.0
        %800 = vmatpush.xpose.msra.mxu0 0.0
        %801 = vmatpush.xpose.msra.mxu0 0.0
        %802 = vmatpush.xpose.msra.mxu0 0.0
        %803 = vmatpush.xpose.msra.mxu0 0.0
        %804 = vmatpush.xpose.msra.mxu0 0.0
        %805 = vmatpush.xpose.msra.mxu0 0.0
        %806 = vmatpush.xpose.msra.mxu0 %v790
        %807 = vmatpush.xpose.msra.mxu0 %v788
        %808 = vmatmul.f32.gmra.mxu0 %v786
        %v809 = vpop.f32.mrf.mxu0
        %v810 = vadd.f32 0.0, %v809
        %811 = vdwg.mxu0
        %v812 = vsel %vm707, %v590, 0
        %v814 = vsel %vm707, %v616, 0
        %v816 = vsel %vm707, %v618, 0
        %818 = vmatpush.xpose.msra.mxu0 0.0
        %819 = vmatpush.xpose.msra.mxu0 0.0
        %820 = vmatpush.xpose.msra.mxu0 0.0
        %821 = vmatpush.xpose.msra.mxu0 0.0
        %822 = vmatpush.xpose.msra.mxu0 0.0
        %823 = vmatpush.xpose.msra.mxu0 0.0
        %824 = vmatpush.xpose.msra.mxu0 0.0
        %825 = vmatpush.xpose.msra.mxu0 0.0
        %826 = vmatpush.xpose.msra.mxu0 0.0
        %827 = vmatpush.xpose.msra.mxu0 0.0
        %828 = vmatpush.xpose.msra.mxu0 0.0
        %829 = vmatpush.xpose.msra.mxu0 0.0
        %830 = vmatpush.xpose.msra.mxu0 0.0
        %831 = vmatpush.xpose.msra.mxu0 0.0
        %832 = vmatpush.xpose.msra.mxu0 %v816
        %833 = vmatpush.xpose.msra.mxu0 %v814
        %834 = vmatmul.f32.gmra.mxu0 %v812
        %v835 = vpop.f32.mrf.mxu0
        %v836 = vadd.f32 0.0, %v835
        %837 = vdwg.mxu0
        %v838 = vsel %vm707, %v592, 0
        %v840 = vsel %vm707, %v620, 0
        %v842 = vsel %vm707, %v622, 0
        %844 = vmatpush.xpose.msra.mxu0 0.0
        %845 = vmatpush.xpose.msra.mxu0 0.0
        %846 = vmatpush.xpose.msra.mxu0 0.0
        %847 = vmatpush.xpose.msra.mxu0 0.0
        %848 = vmatpush.xpose.msra.mxu0 0.0
        %849 = vmatpush.xpose.msra.mxu0 0.0
        %850 = vmatpush.xpose.msra.mxu0 0.0
        %851 = vmatpush.xpose.msra.mxu0 0.0
        %852 = vmatpush.xpose.msra.mxu0 0.0
        %853 = vmatpush.xpose.msra.mxu0 0.0
        %854 = vmatpush.xpose.msra.mxu0 0.0
        %855 = vmatpush.xpose.msra.mxu0 0.0
        %856 = vmatpush.xpose.msra.mxu0 0.0
        %857 = vmatpush.xpose.msra.mxu0 0.0
        %858 = vmatpush.xpose.msra.mxu0 %v842
        %859 = vmatpush.xpose.msra.mxu0 %v840
        %860 = vmatmul.f32.gmra.mxu0 %v838
        %v861 = vpop.f32.mrf.mxu0
        %v862 = vadd.f32 0.0, %v861
        %863 = vdwg.mxu0
        %v864 = vsel %vm707, %v594, 0
        %v866 = vsel %vm707, %v624, 0
        %v868 = vsel %vm707, %v626, 0
        %870 = vmatpush.xpose.msra.mxu0 0.0
        %871 = vmatpush.xpose.msra.mxu0 0.0
        %872 = vmatpush.xpose.msra.mxu0 0.0
        %873 = vmatpush.xpose.msra.mxu0 0.0
        %874 = vmatpush.xpose.msra.mxu0 0.0
        %875 = vmatpush.xpose.msra.mxu0 0.0
        %876 = vmatpush.xpose.msra.mxu0 0.0
        %877 = vmatpush.xpose.msra.mxu0 0.0
        %878 = vmatpush.xpose.msra.mxu0 0.0
        %879 = vmatpush.xpose.msra.mxu0 0.0
        %880 = vmatpush.xpose.msra.mxu0 0.0
        %881 = vmatpush.xpose.msra.mxu0 0.0
        %882 = vmatpush.xpose.msra.mxu0 0.0
        %883 = vmatpush.xpose.msra.mxu0 0.0
        %884 = vmatpush.xpose.msra.mxu0 %v868
        %885 = vmatpush.xpose.msra.mxu0 %v866
        %886 = vmatmul.f32.gmra.mxu0 %v864
        %v887 = vpop.f32.mrf.mxu0
        %v888 = vadd.f32 0.0, %v887
        %889 = vdwg.mxu0
        %v890 = vsel %vm707, %v596, 0
        %v892 = vsel %vm707, %v628, 0
        %v894 = vsel %vm707, %v630, 0
        %896 = vmatpush.xpose.msra.mxu0 0.0
        %897 = vmatpush.xpose.msra.mxu0 0.0
        %898 = vmatpush.xpose.msra.mxu0 0.0
        %899 = vmatpush.xpose.msra.mxu0 0.0
        %900 = vmatpush.xpose.msra.mxu0 0.0
        %901 = vmatpush.xpose.msra.mxu0 0.0
        %902 = vmatpush.xpose.msra.mxu0 0.0
        %903 = vmatpush.xpose.msra.mxu0 0.0
        %904 = vmatpush.xpose.msra.mxu0 0.0
        %905 = vmatpush.xpose.msra.mxu0 0.0
        %906 = vmatpush.xpose.msra.mxu0 0.0
        %907 = vmatpush.xpose.msra.mxu0 0.0
        %908 = vmatpush.xpose.msra.mxu0 0.0
        %909 = vmatpush.xpose.msra.mxu0 0.0
        %910 = vmatpush.xpose.msra.mxu0 %v894
        %911 = vmatpush.xpose.msra.mxu0 %v892
        %912 = vmatmul.f32.gmra.mxu0 %v890
        %v913 = vpop.f32.mrf.mxu0
        %v914 = vadd.f32 0.0, %v913
        %915 = vdwg.mxu0
        %v916 = vsel %vm707, %v598, 0
        %v918 = vsel %vm707, %v632, 0
        %v920 = vsel %vm707, %v634, 0
        %922 = vmatpush.xpose.msra.mxu0 0.0
        %923 = vmatpush.xpose.msra.mxu0 0.0
        %924 = vmatpush.xpose.msra.mxu0 0.0
        %925 = vmatpush.xpose.msra.mxu0 0.0
        %926 = vmatpush.xpose.msra.mxu0 0.0
        %927 = vmatpush.xpose.msra.mxu0 0.0
        %928 = vmatpush.xpose.msra.mxu0 0.0
        %929 = vmatpush.xpose.msra.mxu0 0.0
        %930 = vmatpush.xpose.msra.mxu0 0.0
        %931 = vmatpush.xpose.msra.mxu0 0.0
        %932 = vmatpush.xpose.msra.mxu0 0.0
        %933 = vmatpush.xpose.msra.mxu0 0.0
        %934 = vmatpush.xpose.msra.mxu0 0.0
        %935 = vmatpush.xpose.msra.mxu0 0.0
        %936 = vmatpush.xpose.msra.mxu0 %v920
        %937 = vmatpush.xpose.msra.mxu0 %v918
        %938 = vmatmul.f32.gmra.mxu0 %v916
        %v939 = vpop.f32.mrf.mxu0
        %v940 = vadd.f32 0.0, %v939
        %941 = vdwg.mxu0
        %v942 = vsel %vm707, %v600, 0
        %v944 = vsel %vm707, %v636, 0
        %v946 = vsel %vm707, %v638, 0
        %948 = vmatpush.xpose.msra.mxu0 0.0
        %949 = vmatpush.xpose.msra.mxu0 0.0
        %950 = vmatpush.xpose.msra.mxu0 0.0
        %951 = vmatpush.xpose.msra.mxu0 0.0
        %952 = vmatpush.xpose.msra.mxu0 0.0
        %953 = vmatpush.xpose.msra.mxu0 0.0
        %954 = vmatpush.xpose.msra.mxu0 0.0
        %955 = vmatpush.xpose.msra.mxu0 0.0
        %956 = vmatpush.xpose.msra.mxu0 0.0
        %957 = vmatpush.xpose.msra.mxu0 0.0
        %958 = vmatpush.xpose.msra.mxu0 0.0
        %959 = vmatpush.xpose.msra.mxu0 0.0
        %960 = vmatpush.xpose.msra.mxu0 0.0
        %961 = vmatpush.xpose.msra.mxu0 0.0
        %962 = vmatpush.xpose.msra.mxu0 %v946
        %963 = vmatpush.xpose.msra.mxu0 %v944
        %964 = vmatmul.f32.gmra.mxu0 %v942
        %v965 = vpop.f32.mrf.mxu0
        %v966 = vadd.f32 0.0, %v965
        %967 = vdwg.mxu0
        %v968 = vsel %vm707, %v602, 0
        %v970 = vsel %vm707, %v640, 0
        %v972 = vsel %vm707, %v642, 0
        %974 = vmatpush.xpose.msra.mxu0 0.0
        %975 = vmatpush.xpose.msra.mxu0 0.0
        %976 = vmatpush.xpose.msra.mxu0 0.0
        %977 = vmatpush.xpose.msra.mxu0 0.0
        %978 = vmatpush.xpose.msra.mxu0 0.0
        %979 = vmatpush.xpose.msra.mxu0 0.0
        %980 = vmatpush.xpose.msra.mxu0 0.0
        %981 = vmatpush.xpose.msra.mxu0 0.0
        %982 = vmatpush.xpose.msra.mxu0 0.0
        %983 = vmatpush.xpose.msra.mxu0 0.0
        %984 = vmatpush.xpose.msra.mxu0 0.0
        %985 = vmatpush.xpose.msra.mxu0 0.0
        %986 = vmatpush.xpose.msra.mxu0 0.0
        %987 = vmatpush.xpose.msra.mxu0 0.0
        %988 = vmatpush.xpose.msra.mxu0 %v972
        %989 = vmatpush.xpose.msra.mxu0 %v970
        %990 = vmatmul.f32.gmra.mxu0 %v968
        %v991 = vpop.f32.mrf.mxu0
        %v992 = vadd.f32 0.0, %v991
        %993 = vdwg.mxu0
        %v994 = vsel %vm707, %v604, 0
        %v996 = vsel %vm707, %v644, 0
        %v998 = vsel %vm707, %v646, 0
        %1000 = vmatpush.xpose.msra.mxu0 0.0
        %1001 = vmatpush.xpose.msra.mxu0 0.0
        %1002 = vmatpush.xpose.msra.mxu0 0.0
        %1003 = vmatpush.xpose.msra.mxu0 0.0
        %1004 = vmatpush.xpose.msra.mxu0 0.0
        %1005 = vmatpush.xpose.msra.mxu0 0.0
        %1006 = vmatpush.xpose.msra.mxu0 0.0
        %1007 = vmatpush.xpose.msra.mxu0 0.0
        %1008 = vmatpush.xpose.msra.mxu0 0.0
        %1009 = vmatpush.xpose.msra.mxu0 0.0
        %1010 = vmatpush.xpose.msra.mxu0 0.0
        %1011 = vmatpush.xpose.msra.mxu0 0.0
        %1012 = vmatpush.xpose.msra.mxu0 0.0
        %1013 = vmatpush.xpose.msra.mxu0 0.0
        %1014 = vmatpush.xpose.msra.mxu0 %v998
        %1015 = vmatpush.xpose.msra.mxu0 %v996
        %1016 = vmatmul.f32.gmra.mxu0 %v994
        %v1017 = vpop.f32.mrf.mxu0
        %v1018 = vadd.f32 0.0, %v1017
        %1019 = vdwg.mxu0
        %vm1020 = vcmask 130048
        %v1021 = vsel %vm1020, %v732, -inf
        %1022 = vmax.xlane.f32.xlu0 %v1021
        %v1023 = vpop.xlane.xlu0 %1022
        %v1024 = vsel %vm1020, %v758, -inf
        %1025 = vmax.xlane.f32.xlu0 %v1024
        %v1026 = vpop.xlane.xlu0 %1025
        %v1027 = vsel %vm1020, %v784, -inf
        %1028 = vmax.xlane.f32.xlu0 %v1027
        %v1029 = vpop.xlane.xlu0 %1028
        %v1030 = vsel %vm1020, %v810, -inf
        %1031 = vmax.xlane.f32.xlu0 %v1030
        %v1032 = vpop.xlane.xlu0 %1031
        %v1033 = vsel %vm1020, %v836, -inf
        %1034 = vmax.xlane.f32.xlu0 %v1033
        %v1035 = vpop.xlane.xlu0 %1034
        %v1036 = vsel %vm1020, %v862, -inf
        %1037 = vmax.xlane.f32.xlu0 %v1036
        %v1038 = vpop.xlane.xlu0 %1037
        %v1039 = vsel %vm1020, %v888, -inf
        %1040 = vmax.xlane.f32.xlu0 %v1039
        %v1041 = vpop.xlane.xlu0 %1040
        %v1042 = vsel %vm1020, %v914, -inf
        %1043 = vmax.xlane.f32.xlu0 %v1042
        %v1044 = vpop.xlane.xlu0 %1043
        %v1045 = vsel %vm1020, %v940, -inf
        %1046 = vmax.xlane.f32.xlu0 %v1045
        %v1047 = vpop.xlane.xlu0 %1046
        %v1048 = vsel %vm1020, %v966, -inf
        %1049 = vmax.xlane.f32.xlu0 %v1048
        %v1050 = vpop.xlane.xlu0 %1049
        %v1051 = vsel %vm1020, %v992, -inf
        %1052 = vmax.xlane.f32.xlu0 %v1051
        %v1053 = vpop.xlane.xlu0 %1052
        %v1054 = vsel %vm1020, %v1018, -inf
        %1055 = vmax.xlane.f32.xlu0 %v1054
        %v1056 = vpop.xlane.xlu0 %1055
        %v1057 = vsub.f32 %v732, %v1023
        %v1058 = vsub.f32 %v758, %v1026
        %v1059 = vsub.f32 %v784, %v1029
        %v1060 = vsub.f32 %v810, %v1032
        %v1061 = vsub.f32 %v836, %v1035
        %v1062 = vsub.f32 %v862, %v1038
        %v1063 = vsub.f32 %v888, %v1041
        %v1064 = vsub.f32 %v914, %v1044
        %v1065 = vsub.f32 %v940, %v1047
        %v1066 = vsub.f32 %v966, %v1050
        %v1067 = vsub.f32 %v992, %v1053
        %v1068 = vsub.f32 %v1018, %v1056
        %v1069 = vmul.f32 %v1057, 1.442695
        %v1070 = vpow.pop %v1069
        %v1071 = vmul.f32 %v1058, 1.442695
        %v1072 = vpow.pop %v1071
        %v1073 = vmul.f32 %v1059, 1.442695
        %v1074 = vpow.pop %v1073
        %v1075 = vmul.f32 %v1060, 1.442695
        %v1076 = vpow.pop %v1075
        %v1077 = vmul.f32 %v1061, 1.442695
        %v1078 = vpow.pop %v1077
        %v1079 = vmul.f32 %v1062, 1.442695
        %v1080 = vpow.pop %v1079
        %v1081 = vmul.f32 %v1063, 1.442695
        %v1082 = vpow.pop %v1081
        %v1083 = vmul.f32 %v1064, 1.442695
        %v1084 = vpow.pop %v1083
        %v1085 = vmul.f32 %v1065, 1.442695
        %v1086 = vpow.pop %v1085
        %v1087 = vmul.f32 %v1066, 1.442695
        %v1088 = vpow.pop %v1087
        %v1089 = vmul.f32 %v1067, 1.442695
        %v1090 = vpow.pop %v1089
        %v1091 = vmul.f32 %v1068, 1.442695
        %v1092 = vpow.pop %v1091
        %v1093 = vsel %vm1020, %v1070, 0.0
        %1094 = vadd.xlane.f32.xlu0 %v1093
        %v1095 = vpop.xlane.xlu0 %1094
        %v1096 = vsel %vm1020, %v1072, 0.0
        %1097 = vadd.xlane.f32.xlu0 %v1096
        %v1098 = vpop.xlane.xlu0 %1097
        %v1099 = vsel %vm1020, %v1074, 0.0
        %1100 = vadd.xlane.f32.xlu0 %v1099
        %v1101 = vpop.xlane.xlu0 %1100
        %v1102 = vsel %vm1020, %v1076, 0.0
        %1103 = vadd.xlane.f32.xlu0 %v1102
        %v1104 = vpop.xlane.xlu0 %1103
        %v1105 = vsel %vm1020, %v1078, 0.0
        %1106 = vadd.xlane.f32.xlu0 %v1105
        %v1107 = vpop.xlane.xlu0 %1106
        %v1108 = vsel %vm1020, %v1080, 0.0
        %1109 = vadd.xlane.f32.xlu0 %v1108
        %v1110 = vpop.xlane.xlu0 %1109
        %v1111 = vsel %vm1020, %v1082, 0.0
        %1112 = vadd.xlane.f32.xlu0 %v1111
        %v1113 = vpop.xlane.xlu0 %1112
        %v1114 = vsel %vm1020, %v1084, 0.0
        %1115 = vadd.xlane.f32.xlu0 %v1114
        %v1116 = vpop.xlane.xlu0 %1115
        %v1117 = vsel %vm1020, %v1086, 0.0
        %1118 = vadd.xlane.f32.xlu0 %v1117
        %v1119 = vpop.xlane.xlu0 %1118
        %v1120 = vsel %vm1020, %v1088, 0.0
        %1121 = vadd.xlane.f32.xlu0 %v1120
        %v1122 = vpop.xlane.xlu0 %1121
        %v1123 = vsel %vm1020, %v1090, 0.0
        %1124 = vadd.xlane.f32.xlu0 %v1123
        %v1125 = vpop.xlane.xlu0 %1124
        %v1126 = vsel %vm1020, %v1092, 0.0
        %1127 = vadd.xlane.f32.xlu0 %v1126
        %v1128 = vpop.xlane.xlu0 %1127
        %v1129 = vrcp.pop %v1095
        %v1130 = vrcp.pop %v1098
        %v1131 = vrcp.pop %v1101
        %v1132 = vrcp.pop %v1104
        %v1133 = vrcp.pop %v1107
        %v1134 = vrcp.pop %v1110
        %v1135 = vrcp.pop %v1113
        %v1136 = vrcp.pop %v1116
        %v1137 = vrcp.pop %v1119
        %v1138 = vrcp.pop %v1122
        %v1139 = vrcp.pop %v1125
        %v1140 = vrcp.pop %v1128
        %v1141 = vmul.f32 %v1070, %v1129
        %v1142 = vmul.f32 %v1072, %v1130
        %v1143 = vmul.f32 %v1074, %v1131
        %v1144 = vmul.f32 %v1076, %v1132
        %v1145 = vmul.f32 %v1078, %v1133
        %v1146 = vmul.f32 %v1080, %v1134
        %v1147 = vmul.f32 %v1082, %v1135
        %v1148 = vmul.f32 %v1084, %v1136
        %v1149 = vmul.f32 %v1086, %v1137
        %v1150 = vmul.f32 %v1088, %v1138
        %v1151 = vmul.f32 %v1090, %v1139
        %v1152 = vmul.f32 %v1092, %v1140
        %v1154 = vsel %vm1020, %v1141, 0
        %1156 = vmatpush.msra.mxu0 0.0
        %1157 = vmatpush.msra.mxu0 0.0
        %1158 = vmatpush.msra.mxu0 0.0
        %1159 = vmatpush.msra.mxu0 0.0
        %1160 = vmatpush.msra.mxu0 0.0
        %1161 = vmatpush.msra.mxu0 0.0
        %1162 = vmatpush.msra.mxu0 0.0
        %1163 = vmatpush.msra.mxu0 0.0
        %1164 = vmatpush.msra.mxu0 0.0
        %1165 = vmatpush.msra.mxu0 0.0
        %1166 = vmatpush.msra.mxu0 0.0
        %1167 = vmatpush.msra.mxu0 0.0
        %1168 = vmatpush.msra.mxu0 0.0
        %1169 = vmatpush.msra.mxu0 0.0
        %1170 = vmatpush.msra.mxu0 %v570
        %1171 = vmatpush.msra.mxu0 %v567
        %1172 = vmatmul.f32.gmra.mxu0 %v1154
        %v1173 = vpop.f32.mrf.mxu0
        %v1174 = vadd.f32 0.0, %v1173
        %1175 = vdwg.mxu0
        %v1177 = vsel %vm1020, %v1142, 0
        %1179 = vmatpush.msra.mxu0 0.0
        %1180 = vmatpush.msra.mxu0 0.0
        %1181 = vmatpush.msra.mxu0 0.0
        %1182 = vmatpush.msra.mxu0 0.0
        %1183 = vmatpush.msra.mxu0 0.0
        %1184 = vmatpush.msra.mxu0 0.0
        %1185 = vmatpush.msra.mxu0 0.0
        %1186 = vmatpush.msra.mxu0 0.0
        %1187 = vmatpush.msra.mxu0 0.0
        %1188 = vmatpush.msra.mxu0 0.0
        %1189 = vmatpush.msra.mxu0 0.0
        %1190 = vmatpush.msra.mxu0 0.0
        %1191 = vmatpush.msra.mxu0 0.0
        %1192 = vmatpush.msra.mxu0 0.0
        %1193 = vmatpush.msra.mxu0 %v576
        %1194 = vmatpush.msra.mxu0 %v573
        %1195 = vmatmul.f32.gmra.mxu0 %v1177
        %v1196 = vpop.f32.mrf.mxu0
        %v1197 = vadd.f32 0.0, %v1196
        %1198 = vdwg.mxu0
        %v1200 = vsel %vm1020, %v1143, 0
        %1202 = vmatpush.msra.mxu0 0.0
        %1203 = vmatpush.msra.mxu0 0.0
        %1204 = vmatpush.msra.mxu0 0.0
        %1205 = vmatpush.msra.mxu0 0.0
        %1206 = vmatpush.msra.mxu0 0.0
        %1207 = vmatpush.msra.mxu0 0.0
        %1208 = vmatpush.msra.mxu0 0.0
        %1209 = vmatpush.msra.mxu0 0.0
        %1210 = vmatpush.msra.mxu0 0.0
        %1211 = vmatpush.msra.mxu0 0.0
        %1212 = vmatpush.msra.mxu0 0.0
        %1213 = vmatpush.msra.mxu0 0.0
        %1214 = vmatpush.msra.mxu0 0.0
        %1215 = vmatpush.msra.mxu0 0.0
        %1216 = vmatpush.msra.mxu0 %v582
        %1217 = vmatpush.msra.mxu0 %v579
        %1218 = vmatmul.f32.gmra.mxu0 %v1200
        %v1219 = vpop.f32.mrf.mxu0
        %v1220 = vadd.f32 0.0, %v1219
        %1221 = vdwg.mxu0
        %v1223 = vsel %vm1020, %v1144, 0
        %1225 = vmatpush.msra.mxu0 0.0
        %1226 = vmatpush.msra.mxu0 0.0
        %1227 = vmatpush.msra.mxu0 0.0
        %1228 = vmatpush.msra.mxu0 0.0
        %1229 = vmatpush.msra.mxu0 0.0
        %1230 = vmatpush.msra.mxu0 0.0
        %1231 = vmatpush.msra.mxu0 0.0
        %1232 = vmatpush.msra.mxu0 0.0
        %1233 = vmatpush.msra.mxu0 0.0
        %1234 = vmatpush.msra.mxu0 0.0
        %1235 = vmatpush.msra.mxu0 0.0
        %1236 = vmatpush.msra.mxu0 0.0
        %1237 = vmatpush.msra.mxu0 0.0
        %1238 = vmatpush.msra.mxu0 0.0
        %1239 = vmatpush.msra.mxu0 %v656
        %1240 = vmatpush.msra.mxu0 %v654
        %1241 = vmatmul.f32.gmra.mxu0 %v1223
        %v1242 = vpop.f32.mrf.mxu0
        %v1243 = vadd.f32 0.0, %v1242
        %1244 = vdwg.mxu0
        %v1246 = vsel %vm1020, %v1145, 0
        %1248 = vmatpush.msra.mxu0 0.0
        %1249 = vmatpush.msra.mxu0 0.0
        %1250 = vmatpush.msra.mxu0 0.0
        %1251 = vmatpush.msra.mxu0 0.0
        %1252 = vmatpush.msra.mxu0 0.0
        %1253 = vmatpush.msra.mxu0 0.0
        %1254 = vmatpush.msra.mxu0 0.0
        %1255 = vmatpush.msra.mxu0 0.0
        %1256 = vmatpush.msra.mxu0 0.0
        %1257 = vmatpush.msra.mxu0 0.0
        %1258 = vmatpush.msra.mxu0 0.0
        %1259 = vmatpush.msra.mxu0 0.0
        %1260 = vmatpush.msra.mxu0 0.0
        %1261 = vmatpush.msra.mxu0 0.0
        %1262 = vmatpush.msra.mxu0 %v660
        %1263 = vmatpush.msra.mxu0 %v658
        %1264 = vmatmul.f32.gmra.mxu0 %v1246
        %v1265 = vpop.f32.mrf.mxu0
        %v1266 = vadd.f32 0.0, %v1265
        %1267 = vdwg.mxu0
        %v1269 = vsel %vm1020, %v1146, 0
        %1271 = vmatpush.msra.mxu0 0.0
        %1272 = vmatpush.msra.mxu0 0.0
        %1273 = vmatpush.msra.mxu0 0.0
        %1274 = vmatpush.msra.mxu0 0.0
        %1275 = vmatpush.msra.mxu0 0.0
        %1276 = vmatpush.msra.mxu0 0.0
        %1277 = vmatpush.msra.mxu0 0.0
        %1278 = vmatpush.msra.mxu0 0.0
        %1279 = vmatpush.msra.mxu0 0.0
        %1280 = vmatpush.msra.mxu0 0.0
        %1281 = vmatpush.msra.mxu0 0.0
        %1282 = vmatpush.msra.mxu0 0.0
        %1283 = vmatpush.msra.mxu0 0.0
        %1284 = vmatpush.msra.mxu0 0.0
        %1285 = vmatpush.msra.mxu0 %v664
        %1286 = vmatpush.msra.mxu0 %v662
        %1287 = vmatmul.f32.gmra.mxu0 %v1269
        %v1288 = vpop.f32.mrf.mxu0
        %v1289 = vadd.f32 0.0, %v1288
        %1290 = vdwg.mxu0
        %v1292 = vsel %vm1020, %v1147, 0
        %1294 = vmatpush.msra.mxu0 0.0
        %1295 = vmatpush.msra.mxu0 0.0
        %1296 = vmatpush.msra.mxu0 0.0
        %1297 = vmatpush.msra.mxu0 0.0
        %1298 = vmatpush.msra.mxu0 0.0
        %1299 = vmatpush.msra.mxu0 0.0
        %1300 = vmatpush.msra.mxu0 0.0
        %1301 = vmatpush.msra.mxu0 0.0
        %1302 = vmatpush.msra.mxu0 0.0
        %1303 = vmatpush.msra.mxu0 0.0
        %1304 = vmatpush.msra.mxu0 0.0
        %1305 = vmatpush.msra.mxu0 0.0
        %1306 = vmatpush.msra.mxu0 0.0
        %1307 = vmatpush.msra.mxu0 0.0
        %1308 = vmatpush.msra.mxu0 %v674
        %1309 = vmatpush.msra.mxu0 %v672
        %1310 = vmatmul.f32.gmra.mxu0 %v1292
        %v1311 = vpop.f32.mrf.mxu0
        %v1312 = vadd.f32 0.0, %v1311
        %1313 = vdwg.mxu0
        %v1315 = vsel %vm1020, %v1148, 0
        %1317 = vmatpush.msra.mxu0 0.0
        %1318 = vmatpush.msra.mxu0 0.0
        %1319 = vmatpush.msra.mxu0 0.0
        %1320 = vmatpush.msra.mxu0 0.0
        %1321 = vmatpush.msra.mxu0 0.0
        %1322 = vmatpush.msra.mxu0 0.0
        %1323 = vmatpush.msra.mxu0 0.0
        %1324 = vmatpush.msra.mxu0 0.0
        %1325 = vmatpush.msra.mxu0 0.0
        %1326 = vmatpush.msra.mxu0 0.0
        %1327 = vmatpush.msra.mxu0 0.0
        %1328 = vmatpush.msra.mxu0 0.0
        %1329 = vmatpush.msra.mxu0 0.0
        %1330 = vmatpush.msra.mxu0 0.0
        %1331 = vmatpush.msra.mxu0 %v678
        %1332 = vmatpush.msra.mxu0 %v676
        %1333 = vmatmul.f32.gmra.mxu0 %v1315
        %v1334 = vpop.f32.mrf.mxu0
        %v1335 = vadd.f32 0.0, %v1334
        %1336 = vdwg.mxu0
        %v1338 = vsel %vm1020, %v1149, 0
        %1340 = vmatpush.msra.mxu0 0.0
        %1341 = vmatpush.msra.mxu0 0.0
        %1342 = vmatpush.msra.mxu0 0.0
        %1343 = vmatpush.msra.mxu0 0.0
        %1344 = vmatpush.msra.mxu0 0.0
        %1345 = vmatpush.msra.mxu0 0.0
        %1346 = vmatpush.msra.mxu0 0.0
        %1347 = vmatpush.msra.mxu0 0.0
        %1348 = vmatpush.msra.mxu0 0.0
        %1349 = vmatpush.msra.mxu0 0.0
        %1350 = vmatpush.msra.mxu0 0.0
        %1351 = vmatpush.msra.mxu0 0.0
        %1352 = vmatpush.msra.mxu0 0.0
        %1353 = vmatpush.msra.mxu0 0.0
        %1354 = vmatpush.msra.mxu0 %v682
        %1355 = vmatpush.msra.mxu0 %v680
        %1356 = vmatmul.f32.gmra.mxu0 %v1338
        %v1357 = vpop.f32.mrf.mxu0
        %v1358 = vadd.f32 0.0, %v1357
        %1359 = vdwg.mxu0
        %v1361 = vsel %vm1020, %v1150, 0
        %1363 = vmatpush.msra.mxu0 0.0
        %1364 = vmatpush.msra.mxu0 0.0
        %1365 = vmatpush.msra.mxu0 0.0
        %1366 = vmatpush.msra.mxu0 0.0
        %1367 = vmatpush.msra.mxu0 0.0
        %1368 = vmatpush.msra.mxu0 0.0
        %1369 = vmatpush.msra.mxu0 0.0
        %1370 = vmatpush.msra.mxu0 0.0
        %1371 = vmatpush.msra.mxu0 0.0
        %1372 = vmatpush.msra.mxu0 0.0
        %1373 = vmatpush.msra.mxu0 0.0
        %1374 = vmatpush.msra.mxu0 0.0
        %1375 = vmatpush.msra.mxu0 0.0
        %1376 = vmatpush.msra.mxu0 0.0
        %1377 = vmatpush.msra.mxu0 %v692
        %1378 = vmatpush.msra.mxu0 %v690
        %1379 = vmatmul.f32.gmra.mxu0 %v1361
        %v1380 = vpop.f32.mrf.mxu0
        %v1381 = vadd.f32 0.0, %v1380
        %1382 = vdwg.mxu0
        %v1384 = vsel %vm1020, %v1151, 0
        %1386 = vmatpush.msra.mxu0 0.0
        %1387 = vmatpush.msra.mxu0 0.0
        %1388 = vmatpush.msra.mxu0 0.0
        %1389 = vmatpush.msra.mxu0 0.0
        %1390 = vmatpush.msra.mxu0 0.0
        %1391 = vmatpush.msra.mxu0 0.0
        %1392 = vmatpush.msra.mxu0 0.0
        %1393 = vmatpush.msra.mxu0 0.0
        %1394 = vmatpush.msra.mxu0 0.0
        %1395 = vmatpush.msra.mxu0 0.0
        %1396 = vmatpush.msra.mxu0 0.0
        %1397 = vmatpush.msra.mxu0 0.0
        %1398 = vmatpush.msra.mxu0 0.0
        %1399 = vmatpush.msra.mxu0 0.0
        %1400 = vmatpush.msra.mxu0 %v696
        %1401 = vmatpush.msra.mxu0 %v694
        %1402 = vmatmul.f32.gmra.mxu0 %v1384
        %v1403 = vpop.f32.mrf.mxu0
        %v1404 = vadd.f32 0.0, %v1403
        %1405 = vdwg.mxu0
        %v1407 = vsel %vm1020, %v1152, 0
        %1409 = vmatpush.msra.mxu0 0.0
        %1410 = vmatpush.msra.mxu0 0.0
        %1411 = vmatpush.msra.mxu0 0.0
        %1412 = vmatpush.msra.mxu0 0.0
        %1413 = vmatpush.msra.mxu0 0.0
        %1414 = vmatpush.msra.mxu0 0.0
        %1415 = vmatpush.msra.mxu0 0.0
        %1416 = vmatpush.msra.mxu0 0.0
        %1417 = vmatpush.msra.mxu0 0.0
        %1418 = vmatpush.msra.mxu0 0.0
        %1419 = vmatpush.msra.mxu0 0.0
        %1420 = vmatpush.msra.mxu0 0.0
        %1421 = vmatpush.msra.mxu0 0.0
        %1422 = vmatpush.msra.mxu0 0.0
        %1423 = vmatpush.msra.mxu0 %v700
        %1424 = vmatpush.msra.mxu0 %v698
        %1425 = vmatmul.f32.gmra.mxu0 %v1407
        %v1426 = vpop.f32.mrf.mxu0
        %v1427 = vadd.f32 0.0, %v1426
        %1428 = vdwg.mxu0
        %v1429 = vld [vmem:[#allocation10] sm:$0xff]
        %v1430 = vld [vmem:[#allocation10 + $0x8] sm:$0xff]
        %v1431 = vld [vmem:[#allocation10 + $0x10] sm:$0xff]
        %v1432 = vld [vmem:[#allocation10 + $0x18] sm:$0xff]
        %v1433 = vld [vmem:[#allocation10 + $0x20] sm:$0xff]
        %v1434 = vld [vmem:[#allocation10 + $0x28] sm:$0xff]
        %v1435 = vld [vmem:[#allocation10 + $0x30] sm:$0xff]
        %v1436 = vld [vmem:[#allocation10 + $0x38] sm:$0xff]
        %v1438 = vsel %vm707, %v1243, 0
        %v1441 = vsel %vm707, %v1266, 0
        %v1444 = vsel %vm707, %v1289, 0
        %1446 = vmatpush.msra.mxu0 0.0
        %1447 = vmatpush.msra.mxu0 0.0
        %1448 = vmatpush.msra.mxu0 0.0
        %1449 = vmatpush.msra.mxu0 0.0
        %1450 = vmatpush.msra.mxu0 0.0
        %1451 = vmatpush.msra.mxu0 0.0
        %1452 = vmatpush.msra.mxu0 0.0
        %1453 = vmatpush.msra.mxu0 0.0
        %1454 = vmatpush.msra.mxu0 0.0
        %1455 = vmatpush.msra.mxu0 0.0
        %1456 = vmatpush.msra.mxu0 0.0
        %1457 = vmatpush.msra.mxu0 0.0
        %1458 = vmatpush.msra.mxu0 %v1436
        %1459 = vmatpush.msra.mxu0 %v1435
        %1460 = vmatpush.msra.mxu0 %v1434
        %1461 = vmatpush.msra.mxu0 %v1433
        %1462 = vmatmul.f32.gmra.mxu0 %v1438
        %v1463 = vpop.f32.mrf.mxu0
        %v1464 = vadd.f32 0.0, %v1463
        %1465 = vmatmul.f32.gmra.mxu0 %v1441
        %v1466 = vpop.f32.mrf.mxu0
        %v1467 = vadd.f32 0.0, %v1466
        %1468 = vmatmul.f32.gmra.mxu0 %v1444
        %v1469 = vpop.f32.mrf.mxu0
        %v1470 = vadd.f32 0.0, %v1469
        %1471 = vdwg.mxu0
        %v1473 = vsel %vm707, %v1174, 0
        %v1476 = vsel %vm707, %v1197, 0
        %v1479 = vsel %vm707, %v1220, 0
        %1481 = vmatpush.msra.mxu0 0.0
        %1482 = vmatpush.msra.mxu0 0.0
        %1483 = vmatpush.msra.mxu0 0.0
        %1484 = vmatpush.msra.mxu0 0.0
        %1485 = vmatpush.msra.mxu0 0.0
        %1486 = vmatpush.msra.mxu0 0.0
        %1487 = vmatpush.msra.mxu0 0.0
        %1488 = vmatpush.msra.mxu0 0.0
        %1489 = vmatpush.msra.mxu0 0.0
        %1490 = vmatpush.msra.mxu0 0.0
        %1491 = vmatpush.msra.mxu0 0.0
        %1492 = vmatpush.msra.mxu0 0.0
        %1493 = vmatpush.msra.mxu0 %v1432
        %1494 = vmatpush.msra.mxu0 %v1431
        %1495 = vmatpush.msra.mxu0 %v1430
        %1496 = vmatpush.msra.mxu0 %v1429
        %1497 = vmatmul.f32.gmra.mxu0 %v1473
        %v1498 = vpop.f32.mrf.mxu0
        %v1499 = vadd.f32 %v1464, %v1498
        %1500 = vmatmul.f32.gmra.mxu0 %v1476
        %v1501 = vpop.f32.mrf.mxu0
        %v1502 = vadd.f32 %v1467, %v1501
        %1503 = vmatmul.f32.gmra.mxu0 %v1479
        %v1504 = vpop.f32.mrf.mxu0
        %v1505 = vadd.f32 %v1470, %v1504
        %1506 = vdwg.mxu0
        %v1507 = vld [vmem:[#allocation10 + $0x40] sm:$0xff]
        %v1508 = vld [vmem:[#allocation10 + $0x48] sm:$0xff]
        %v1509 = vld [vmem:[#allocation10 + $0x50] sm:$0xff]
        %v1510 = vld [vmem:[#allocation10 + $0x58] sm:$0xff]
        %v1512 = vsel %vm707, %v1312, 0
        %v1515 = vsel %vm707, %v1335, 0
        %v1518 = vsel %vm707, %v1358, 0
        %1520 = vmatpush.msra.mxu0 0.0
        %1521 = vmatpush.msra.mxu0 0.0
        %1522 = vmatpush.msra.mxu0 0.0
        %1523 = vmatpush.msra.mxu0 0.0
        %1524 = vmatpush.msra.mxu0 0.0
        %1525 = vmatpush.msra.mxu0 0.0
        %1526 = vmatpush.msra.mxu0 0.0
        %1527 = vmatpush.msra.mxu0 0.0
        %1528 = vmatpush.msra.mxu0 0.0
        %1529 = vmatpush.msra.mxu0 0.0
        %1530 = vmatpush.msra.mxu0 0.0
        %1531 = vmatpush.msra.mxu0 0.0
        %1532 = vmatpush.msra.mxu0 %v1510
        %1533 = vmatpush.msra.mxu0 %v1509
        %1534 = vmatpush.msra.mxu0 %v1508
        %1535 = vmatpush.msra.mxu0 %v1507
        %1536 = vmatmul.f32.gmra.mxu0 %v1512
        %v1537 = vpop.f32.mrf.mxu0
        %v1538 = vadd.f32 0.0, %v1537
        %1539 = vmatmul.f32.gmra.mxu0 %v1515
        %v1540 = vpop.f32.mrf.mxu0
        %v1541 = vadd.f32 0.0, %v1540
        %1542 = vmatmul.f32.gmra.mxu0 %v1518
        %v1543 = vpop.f32.mrf.mxu0
        %v1544 = vadd.f32 0.0, %v1543
        %1545 = vdwg.mxu0
        %v1546 = vadd.f32 %v1499, %v1538
        %v1547 = vadd.f32 %v1502, %v1541
        %v1548 = vadd.f32 %v1505, %v1544
        %v1549 = vld [vmem:[#allocation10 + $0x60] sm:$0xff]
        %v1550 = vld [vmem:[#allocation10 + $0x68] sm:$0xff]
        %v1551 = vld [vmem:[#allocation10 + $0x70] sm:$0xff]
        %v1552 = vld [vmem:[#allocation10 + $0x78] sm:$0xff]
        %v1554 = vsel %vm707, %v1381, 0
        %v1557 = vsel %vm707, %v1404, 0
        %v1560 = vsel %vm707, %v1427, 0
        %1562 = vmatpush.msra.mxu0 0.0
        %1563 = vmatpush.msra.mxu0 0.0
        %1564 = vmatpush.msra.mxu0 0.0
        %1565 = vmatpush.msra.mxu0 0.0
        %1566 = vmatpush.msra.mxu0 0.0
        %1567 = vmatpush.msra.mxu0 0.0
        %1568 = vmatpush.msra.mxu0 0.0
        %1569 = vmatpush.msra.mxu0 0.0
        %1570 = vmatpush.msra.mxu0 0.0
        %1571 = vmatpush.msra.mxu0 0.0
        %1572 = vmatpush.msra.mxu0 0.0
        %1573 = vmatpush.msra.mxu0 0.0
        %1574 = vmatpush.msra.mxu0 %v1552
        %1575 = vmatpush.msra.mxu0 %v1551
        %1576 = vmatpush.msra.mxu0 %v1550
        %1577 = vmatpush.msra.mxu0 %v1549
        %1578 = vmatmul.f32.gmra.mxu0 %v1554
        %v1579 = vpop.f32.mrf.mxu0
        %v1580 = vadd.f32 0.0, %v1579
        %1581 = vmatmul.f32.gmra.mxu0 %v1557
        %v1582 = vpop.f32.mrf.mxu0
        %v1583 = vadd.f32 0.0, %v1582
        %1584 = vmatmul.f32.gmra.mxu0 %v1560
        %v1585 = vpop.f32.mrf.mxu0
        %v1586 = vadd.f32 0.0, %v1585
        %1587 = vdwg.mxu0
        %v1588 = vadd.f32 %v1546, %v1580
        %v1589 = vadd.f32 %v1547, %v1583
        %v1590 = vadd.f32 %v1548, %v1586
        %v1591 = vld [vmem:[%s7] sm:$0x1]
        %v1593 = vperm.slane %v1591, 0
        %v1595 = vadd.f32 %v1588, %v1593
        %v1596 = vadd.f32 %v1589, %v1593
        %v1597 = vadd.f32 %v1590, %v1593
        %1598 = vst [vmem:[%s417] sm:$0xff] %v1595
        %1599 = vst [vmem:[%s417 + $0x8] sm:$0xff] %v1596
        %1600 = vst [vmem:[%s417 + $0x10] sm:$0xff] %v1597
        %s1601 = sand.u32 %s215, 1
        %s1602 = scalar_lea.sflag [#allocation4], %s1601
        %s1603 = sand.u32 %s215, 1
        %s1604 = smul.addr %s1603, 24
        %s1605 = scalar_lea.vmem [#allocation11], %s1604
        // Predicated region
        $region73: #{tpu_custom_call.1} parent=51 // pred_check
          %p1606 = pneg %p225
        $region74: #{tpu_custom_call.1} parent=51 // pred_check_branch
          %1608 = sbr.rel (%p1606) target = $region76
        $region75: #{tpu_custom_call.1} parent=51 // pred_region
          %s1609 = smul.u32 3, %s29
          %1611 = vsyncadd %s1602, 0
          %s1612 = smul.addr %s1609, 8
          %s1613 = scalar_lea.hbm %s8, %s1612
          %s1614 = sshll.u32 %s1605, 4
          %s1615 = int_to_ptr.vmem [resolvable:$true] %s1614
          %s1616 = sshll.u32 %s1613, 4
          %s1617 = int_to_ptr.hbm [resolvable:$true] %s1616
          %1622 = dma.vmem_to_hbm [thread:$0]  %s1615, 384, %s1617, %s1602, 128, 128, 8
        $region76: #{tpu_custom_call.1} parent=51 // pred_fallthru
          _
      $region52: #{tpu_custom_call.1} parent=5 // pred_fallthru
        _
      %p1623 = scmp.le.s32.totalorder 2, %s24
      // Predicated region
      $region77: #{tpu_custom_call.1} parent=5 // pred_check
        %p1624 = pneg %p1623
      $region78: #{tpu_custom_call.1} parent=5 // pred_check_branch
        %1626 = sbr.rel (%p1624) target = $region80
      $region79: #{tpu_custom_call.1} parent=5 // pred_region
        %s1627 = ssub.s32 %s24, 2
        // Predicated region
        $region81: #{tpu_custom_call.1} parent=79 // pred_check
          %p1628 = pneg %p231
        $region82: #{tpu_custom_call.1} parent=79 // pred_check_branch
          %1630 = sbr.rel (%p1628) target = $region84
        $region83: #{tpu_custom_call.1} parent=79 // pred_region
          %s1631 = sand.u32 %s216, 1
          %s1632 = scalar_lea.sflag [#allocation4], %s1631
          %s1633 = sand.u32 %s216, 1
          %s1634 = smul.addr %s1633, 24
          %s1635 = scalar_lea.vmem [#allocation11], %s1634
          %1637 = dma.done %s1632, 384
        $region84: #{tpu_custom_call.1} parent=79 // pred_fallthru
          _
      $region80: #{tpu_custom_call.1} parent=5 // pred_fallthru
        _
    $region6: #{tpu_custom_call.1} parent=1 // loop_footer
      %s28 = sadd.s32 1, %s24
    $region7: #{tpu_custom_call.1} parent=1 // loop_footer_branch
      %23 = sbr.rel target = $region3
    $region8: #{tpu_custom_call.1} parent=1 // loop_exit
      _
    %1638 = vsyncpa [#allocation3], 1
    %s1639 = scalar_lea.sflag [#allocation3], 1
    %1640 = vsyncpa %s1639, 1
    %1641 = vsyncpa [#allocation6], 1
    %s1642 = scalar_lea.sflag [#allocation6], 1
    %1643 = vsyncpa %s1642, 1
    %1644 = vsyncpa [#allocation9], 1
    %1645 = vsyncpa [#allocation4], 1
    %s1646 = scalar_lea.sflag [#allocation4], 1
    %1647 = vsyncpa %s1646, 1

</llo_original>
